<compile_context>
chip_gen: v6e
topology: v6e:2x2x1
jax: 0.10.0
libtpu: 0.0.40
codegen_flags: <defaults>
</compile_context>

<pallas_src>
import jax
import jax.numpy as jnp
from jax import lax
from jax.experimental import pallas as pl
from jax.experimental.pallas import tpu as pltpu

EPS = 1e-5
MATMUL_DTYPE = jnp.bfloat16   # MXU operand dtype; accumulation / VPU math are f32


# --------------------------------------------------------------------------
# wrapper-side weight preparation
# --------------------------------------------------------------------------
def _banded_weights(w, W, Cin, Cout):
    """(3,3,Cin,Cout) HWIO conv weights -> per-dy block-banded matmul RHS.

    Returns (3, (W+2)*Cin, W*Cout) with
        B[dy, (x+dx)*Cin + ci, x*Cout + co] = w[dy, dx, ci, co]
    so a 'SAME' 3x3 conv over the lane-folded padded rows becomes
        out[y, :] = sum_dy  pad[y+dy, :] @ B[dy]          (K = (W+2)*Cin).
    """
    xs = jnp.arange(W)
    blocks = jnp.zeros((3, W + 2, W, Cin, Cout), w.dtype)    # [dy, xp, x, ci, co]
    for dx in range(3):
        vals = jnp.broadcast_to(w[:, dx][:, None, :, :], (3, W, Cin, Cout))
        blocks = blocks.at[:, xs + dx, xs].set(vals)
    return blocks.transpose(0, 1, 3, 2, 4).reshape(3, (W + 2) * Cin, W * Cout)


# --------------------------------------------------------------------------
# fused kernel (whole batch in one grid step)
# --------------------------------------------------------------------------
def _make_kernel(N, H, W, C):
    Cout = C
    WC, WpC = W * C, (W + 2) * C
    inv_count = 1.0 / float(N * H * W)

    def fold(row):                       # (1, W*C) -> (1, C): sum over x groups
        acc = row[:, 0:Cout]
        for xi in range(1, W):
            acc = acc + row[:, xi * Cout:(xi + 1) * Cout]
        return acc

    def tile(vec):                       # (1, C) -> (1, W*C), period C
        return jnp.concatenate([vec] * W, axis=1)

    def conv3x3(inp, pad_ref, w_ref, bias_t):
        # inp: (N*H, W*C) f32; w_ref: (3, (W+2)*C, W*Cout) bf16 (banded)
        for n in range(N):               # interior write; halo already zero
            pad_ref[n, 1:H + 1, C:(W + 1) * C] = inp[n * H:(n + 1) * H, :]
        out = None
        for dy in range(3):
            lhs = jnp.concatenate(
                [pad_ref[n, dy:dy + H, :] for n in range(N)], axis=0)
            part = jnp.dot(lhs.astype(MATMUL_DTYPE), w_ref[dy],
                           preferred_element_type=jnp.float32)
            out = part if out is None else out + part
        return out + bias_t              # (N*H, W*Cout) f32

    def batchnorm(y, gamma_t, beta_t):
        # training-mode BN over the full batch; two-pass (mean-shifted) stats
        row_sum = jnp.sum(y, axis=0, keepdims=True)              # (1, W*C)
        mean_t = tile(fold(row_sum) * inv_count)
        d = y - mean_t
        row_sq = jnp.sum(d * d, axis=0, keepdims=True)
        var_t = tile(fold(row_sq) * inv_count)
        return d * (gamma_t * lax.rsqrt(var_t + EPS)) + beta_t

    def kernel(x_ref, w1_ref, w2_ref, vec_ref, out_ref, pad_ref):
        pad_ref[...] = jnp.zeros((N, H + 2, WpC), jnp.float32)   # zero halo once
        x = x_ref[...]
        b1_t, g1_t, be1_t = vec_ref[0:1, :], vec_ref[1:2, :], vec_ref[2:3, :]
        b2_t, g2_t, be2_t = vec_ref[3:4, :], vec_ref[4:5, :], vec_ref[5:6, :]
        y1 = jnp.maximum(
            batchnorm(conv3x3(x, pad_ref, w1_ref, b1_t), g1_t, be1_t), 0.0)
        y2 = batchnorm(conv3x3(y1, pad_ref, w2_ref, b2_t), g2_t, be2_t)
        out_ref[...] = jnp.maximum(y2 + x, 0.0)

    return kernel


# --------------------------------------------------------------------------
# wrappers
# --------------------------------------------------------------------------
def residual_block_nhwc(x, params):
    """x: (N, H, W, C) float32 NHWC -> (N, H, W, C) float32."""
    w1, b1, g1, be1, w2, b2, g2, be2 = params
    N, H, W, C = x.shape
    Cout = w1.shape[-1]
    assert C == Cout, "residual add requires in_channels == out_channels"

    w1b = _banded_weights(w1, W, C, Cout).astype(MATMUL_DTYPE)
    w2b = _banded_weights(w2, W, Cout, Cout).astype(MATMUL_DTYPE)
    # per-channel bias / gamma / beta, pre-tiled to W*Cout lanes (period Cout)
    vecs = jnp.stack([jnp.tile(v.astype(jnp.float32), W)
                      for v in (b1, g1, be1, b2, g2, be2)])       # (6, W*Cout)
    x2d = x.reshape(N * H, W * C).astype(jnp.float32)             # lane-folded

    out2d = pl.pallas_call(
        _make_kernel(N, H, W, C),
        grid=(1,),
        in_specs=[pl.BlockSpec((N * H, W * C), lambda i: (0, 0)),
                  pl.BlockSpec((3, (W + 2) * C, W * Cout), lambda i: (0, 0, 0)),
                  pl.BlockSpec((3, (W + 2) * Cout, W * Cout), lambda i: (0, 0, 0)),
                  pl.BlockSpec((6, W * Cout), lambda i: (0, 0))],
        out_specs=pl.BlockSpec((N * H, W * Cout), lambda i: (0, 0)),
        out_shape=jax.ShapeDtypeStruct((N * H, W * Cout), jnp.float32),
        scratch_shapes=[pltpu.VMEM((N, H + 2, (W + 2) * C), jnp.float32)],
        compiler_params=pltpu.CompilerParams(dimension_semantics=("arbitrary",)),
    )(x2d, w1b, w2b, vecs)
    return out2d.reshape(N, H, W, Cout)


@jax.jit
def residual_block(x_nchw, params):
    """PyTorch-layout entry point: (N, C, H, W) float32 -> (N, C, H, W)."""
    x = jnp.transpose(x_nchw, (0, 2, 3, 1))                       # NCHW -> NHWC
    out = residual_block_nhwc(x, params)
    return jnp.transpose(out, (0, 3, 1, 2))                       # NHWC -> NCHW


# --------------------------------------------------------------------------
# pure-JAX reference (mirrors the PyTorch forward in training mode, with the
# same bf16 conv-operand / f32-accumulation precision choice)
# --------------------------------------------------------------------------
def _reference_nhwc(x, params):
    w1, b1, g1, be1, w2, b2, g2, be2 = params
    dn = ('NHWC', 'HWIO', 'NHWC')

    def conv(t, w, b):
        out = lax.conv_general_dilated(
            t.astype(MATMUL_DTYPE), w.astype(MATMUL_DTYPE), (1, 1), 'SAME',
            dimension_numbers=dn, preferred_element_type=jnp.float32)
        return out + b

    def bn(t, g, be):
        mu = jnp.mean(t, axis=(0, 1, 2), keepdims=True)
        var = jnp.mean((t - mu) ** 2, axis=(0, 1, 2), keepdims=True)
        return (t - mu) * lax.rsqrt(var + EPS) * g + be

    y = jnp.maximum(bn(conv(x, w1, b1), g1, be1), 0.0)
    z = bn(conv(y, w2, b2), g2, be2)
    return jnp.maximum(z + x, 0.0)


if __name__ == "__main__":
    # Small shapes: batch=2, in_channels=out_channels=4, spatial=16x16.
    N, C, H, W = 2, 4, 16, 16
    key = jax.random.PRNGKey(0)
    kx, kw1, kb1, kw2, kb2 = jax.random.split(key, 5)

    x_nchw = jax.random.normal(kx, (N, C, H, W), dtype=jnp.float32)

    # Conv weights in HWIO = (3, 3, Cin, Cout); BN affine at PyTorch defaults.
    w1 = 0.1 * jax.random.normal(kw1, (3, 3, C, C), dtype=jnp.float32)
    b1 = 0.05 * jax.random.normal(kb1, (C,), dtype=jnp.float32)
    w2 = 0.1 * jax.random.normal(kw2, (3, 3, C, C), dtype=jnp.float32)
    b2 = 0.05 * jax.random.normal(kb2, (C,), dtype=jnp.float32)
    g1 = jnp.ones((C,), jnp.float32)
    be1 = jnp.zeros((C,), jnp.float32)
    g2 = jnp.ones((C,), jnp.float32)
    be2 = jnp.zeros((C,), jnp.float32)
    params = (w1, b1, g1, be1, w2, b2, g2, be2)

    out = jax.block_until_ready(residual_block(x_nchw, params))
    ref = jax.block_until_ready(
        jnp.transpose(
            _reference_nhwc(jnp.transpose(x_nchw, (0, 2, 3, 1)), params),
            (0, 3, 1, 2)))

    assert out.shape == (N, C, H, W)
    assert jnp.allclose(out, ref, rtol=2e-3, atol=2e-3), "mismatch vs reference"
    print("KERNEL_OK")
</pallas_src>

<mosaic_0001>
module attributes {stable_mosaic.version = 11 : i64} {
  func.func @kernel(%arg0: i32, %arg1: memref<32x64xf32, #tpu.memory_space<vmem>>, %arg2: memref<3x72x64xbf16, #tpu.memory_space<vmem>>, %arg3: memref<3x72x64xbf16, #tpu.memory_space<vmem>>, %arg4: memref<6x64xf32, #tpu.memory_space<vmem>>, %arg5: memref<32x64xf32, #tpu.memory_space<vmem>>, %arg6: memref<2x18x72xf32, #tpu.memory_space<vmem>>) attributes {dimension_semantics = [#tpu.dimension_semantics<arbitrary>], iteration_bounds = array<i64: 1>, scalar_prefetch = 0 : i64, scratch_operands = 1 : i64, tpu.core_type = #tpu.core_type<tc>, window_params = [{pipeline_mode = #tpu.pipeline_mode<synchronous>, transform_indices = @transform_0, window_bounds = array<i64: 32, 64>}, {pipeline_mode = #tpu.pipeline_mode<synchronous>, transform_indices = @transform_1, window_bounds = array<i64: 3, 72, 64>}, {pipeline_mode = #tpu.pipeline_mode<synchronous>, transform_indices = @transform_2, window_bounds = array<i64: 3, 72, 64>}, {pipeline_mode = #tpu.pipeline_mode<synchronous>, transform_indices = @transform_3, window_bounds = array<i64: 6, 64>}, {pipeline_mode = #tpu.pipeline_mode<synchronous>, transform_indices = @transform_4, window_bounds = array<i64: 32, 64>}]} {
    %cst = arith.constant 0.000000e+00 : f32
    %0 = vector.broadcast %cst : f32 to vector<2x18x72xf32>
    %c0 = arith.constant 0 : index
    %c0_0 = arith.constant 0 : index
    %c0_1 = arith.constant 0 : index
    %1 = vector.load %arg6[%c0, %c0_0, %c0_1] : memref<2x18x72xf32, #tpu.memory_space<vmem>>, vector<2x18x72xf32>
    tpu.vector_store %arg6[%c0, %c0_0, %c0_1], %0 {strides = array<i32>} : memref<2x18x72xf32, #tpu.memory_space<vmem>>, vector<2x18x72xf32>,
    %c0_2 = arith.constant 0 : index
    %c0_3 = arith.constant 0 : index
    %2 = vector.load %arg1[%c0_2, %c0_3] : memref<32x64xf32, #tpu.memory_space<vmem>>, vector<32x64xf32>
    %c0_4 = arith.constant 0 : index
    %c0_5 = arith.constant 0 : index
    %3 = vector.load %arg4[%c0_4, %c0_5] : memref<6x64xf32, #tpu.memory_space<vmem>>, vector<1x64xf32>
    %c1 = arith.constant 1 : index
    %c0_6 = arith.constant 0 : index
    %4 = vector.load %arg4[%c1, %c0_6] : memref<6x64xf32, #tpu.memory_space<vmem>>, vector<1x64xf32>
    %c2 = arith.constant 2 : index
    %c0_7 = arith.constant 0 : index
    %5 = vector.load %arg4[%c2, %c0_7] : memref<6x64xf32, #tpu.memory_space<vmem>>, vector<1x64xf32>
    %c3 = arith.constant 3 : index
    %c0_8 = arith.constant 0 : index
    %6 = vector.load %arg4[%c3, %c0_8] : memref<6x64xf32, #tpu.memory_space<vmem>>, vector<1x64xf32>
    %c4 = arith.constant 4 : index
    %c0_9 = arith.constant 0 : index
    %7 = vector.load %arg4[%c4, %c0_9] : memref<6x64xf32, #tpu.memory_space<vmem>>, vector<1x64xf32>
    %c5 = arith.constant 5 : index
    %c0_10 = arith.constant 0 : index
    %8 = vector.load %arg4[%c5, %c0_10] : memref<6x64xf32, #tpu.memory_space<vmem>>, vector<1x64xf32>
    %9 = vector.extract_strided_slice %2 {offsets = [0, 0], sizes = [16, 64], strides = [1, 1]} : vector<32x64xf32> to vector<16x64xf32>
    %c0_11 = arith.constant 0 : index
    %c1_12 = arith.constant 1 : index
    %c4_13 = arith.constant 4 : index
    %10 = vector.load %arg6[%c0_11, %c1_12, %c4_13] : memref<2x18x72xf32, #tpu.memory_space<vmem>>, vector<1x16x64xf32>
    %11 = vector.shape_cast %10 : vector<1x16x64xf32> to vector<16x64xf32>
    %12 = vector.shape_cast %9 : vector<16x64xf32> to vector<1x16x64xf32>
    tpu.vector_store %arg6[%c0_11, %c1_12, %c4_13], %12 {strides = array<i32>} : memref<2x18x72xf32, #tpu.memory_space<vmem>>, vector<1x16x64xf32>,
    %13 = vector.extract_strided_slice %2 {offsets = [16, 0], sizes = [16, 64], strides = [1, 1]} : vector<32x64xf32> to vector<16x64xf32>
    %c1_14 = arith.constant 1 : index
    %c1_15 = arith.constant 1 : index
    %c4_16 = arith.constant 4 : index
    %14 = vector.load %arg6[%c1_14, %c1_15, %c4_16] : memref<2x18x72xf32, #tpu.memory_space<vmem>>, vector<1x16x64xf32>
    %15 = vector.shape_cast %14 : vector<1x16x64xf32> to vector<16x64xf32>
    %16 = vector.shape_cast %13 : vector<16x64xf32> to vector<1x16x64xf32>
    tpu.vector_store %arg6[%c1_14, %c1_15, %c4_16], %16 {strides = array<i32>} : memref<2x18x72xf32, #tpu.memory_space<vmem>>, vector<1x16x64xf32>,
    %c0_17 = arith.constant 0 : index
    %c0_18 = arith.constant 0 : index
    %c0_19 = arith.constant 0 : index
    %17 = vector.load %arg6[%c0_17, %c0_18, %c0_19] : memref<2x18x72xf32, #tpu.memory_space<vmem>>, vector<1x16x72xf32>
    %18 = vector.shape_cast %17 : vector<1x16x72xf32> to vector<16x72xf32>
    %c1_20 = arith.constant 1 : index
    %c0_21 = arith.constant 0 : index
    %c0_22 = arith.constant 0 : index
    %19 = vector.load %arg6[%c1_20, %c0_21, %c0_22] : memref<2x18x72xf32, #tpu.memory_space<vmem>>, vector<1x16x72xf32>
    %20 = vector.shape_cast %19 : vector<1x16x72xf32> to vector<16x72xf32>
    %21 = tpu.concatenate %18, %20 in 0 : vector<16x72xf32>, vector<16x72xf32> -> vector<32x72xf32>
    %22 = arith.truncf %21 : vector<32x72xf32> to vector<32x72xbf16>
    %c0_23 = arith.constant 0 : index
    %c0_24 = arith.constant 0 : index
    %c0_25 = arith.constant 0 : index
    %23 = vector.load %arg2[%c0_23, %c0_24, %c0_25] : memref<3x72x64xbf16, #tpu.memory_space<vmem>>, vector<1x72x64xbf16>
    %24 = vector.shape_cast %23 : vector<1x72x64xbf16> to vector<72x64xbf16>
    %cst_26 = arith.constant dense<0.000000e+00> : vector<32x64xf32>
    %25 = tpu.matmul %22, %24, %cst_26 {dimension_numbers = #tpu.dot_dimension_numbers<[1], [0], [0], [1], [0, 0, 1, 1], [], []>} : vector<32x72xbf16>, vector<72x64xbf16>, vector<32x64xf32> -> vector<32x64xf32>
    %c0_27 = arith.constant 0 : index
    %c1_28 = arith.constant 1 : index
    %c0_29 = arith.constant 0 : index
    %26 = vector.load %arg6[%c0_27, %c1_28, %c0_29] : memref<2x18x72xf32, #tpu.memory_space<vmem>>, vector<1x16x72xf32>
    %27 = vector.shape_cast %26 : vector<1x16x72xf32> to vector<16x72xf32>
    %c1_30 = arith.constant 1 : index
    %c1_31 = arith.constant 1 : index
    %c0_32 = arith.constant 0 : index
    %28 = vector.load %arg6[%c1_30, %c1_31, %c0_32] : memref<2x18x72xf32, #tpu.memory_space<vmem>>, vector<1x16x72xf32>
    %29 = vector.shape_cast %28 : vector<1x16x72xf32> to vector<16x72xf32>
    %30 = tpu.concatenate %27, %29 in 0 : vector<16x72xf32>, vector<16x72xf32> -> vector<32x72xf32>
    %31 = arith.truncf %30 : vector<32x72xf32> to vector<32x72xbf16>
    %c1_33 = arith.constant 1 : index
    %c0_34 = arith.constant 0 : index
    %c0_35 = arith.constant 0 : index
    %32 = vector.load %arg2[%c1_33, %c0_34, %c0_35] : memref<3x72x64xbf16, #tpu.memory_space<vmem>>, vector<1x72x64xbf16>
    %33 = vector.shape_cast %32 : vector<1x72x64xbf16> to vector<72x64xbf16>
    %cst_36 = arith.constant dense<0.000000e+00> : vector<32x64xf32>
    %34 = tpu.matmul %31, %33, %cst_36 {dimension_numbers = #tpu.dot_dimension_numbers<[1], [0], [0], [1], [0, 0, 1, 1], [], []>} : vector<32x72xbf16>, vector<72x64xbf16>, vector<32x64xf32> -> vector<32x64xf32>
    %35 = arith.addf %25, %34 : vector<32x64xf32>
    %c0_37 = arith.constant 0 : index
    %c2_38 = arith.constant 2 : index
    %c0_39 = arith.constant 0 : index
    %36 = vector.load %arg6[%c0_37, %c2_38, %c0_39] : memref<2x18x72xf32, #tpu.memory_space<vmem>>, vector<1x16x72xf32>
    %37 = vector.shape_cast %36 : vector<1x16x72xf32> to vector<16x72xf32>
    %c1_40 = arith.constant 1 : index
    %c2_41 = arith.constant 2 : index
    %c0_42 = arith.constant 0 : index
    %38 = vector.load %arg6[%c1_40, %c2_41, %c0_42] : memref<2x18x72xf32, #tpu.memory_space<vmem>>, vector<1x16x72xf32>
    %39 = vector.shape_cast %38 : vector<1x16x72xf32> to vector<16x72xf32>
    %40 = tpu.concatenate %37, %39 in 0 : vector<16x72xf32>, vector<16x72xf32> -> vector<32x72xf32>
    %41 = arith.truncf %40 : vector<32x72xf32> to vector<32x72xbf16>
    %c2_43 = arith.constant 2 : index
    %c0_44 = arith.constant 0 : index
    %c0_45 = arith.constant 0 : index
    %42 = vector.load %arg2[%c2_43, %c0_44, %c0_45] : memref<3x72x64xbf16, #tpu.memory_space<vmem>>, vector<1x72x64xbf16>
    %43 = vector.shape_cast %42 : vector<1x72x64xbf16> to vector<72x64xbf16>
    %cst_46 = arith.constant dense<0.000000e+00> : vector<32x64xf32>
    %44 = tpu.matmul %41, %43, %cst_46 {dimension_numbers = #tpu.dot_dimension_numbers<[1], [0], [0], [1], [0, 0, 1, 1], [], []>} : vector<32x72xbf16>, vector<72x64xbf16>, vector<32x64xf32> -> vector<32x64xf32>
    %45 = arith.addf %35, %44 : vector<32x64xf32>
    %46 = vector.broadcast %3 : vector<1x64xf32> to vector<32x64xf32>
    %47 = arith.addf %45, %46 : vector<32x64xf32>
    %cst_47 = arith.constant dense<0.000000e+00> : vector<64xf32>
    %48 = vector.multi_reduction <add>, %47, %cst_47 [0] : vector<32x64xf32> to vector<64xf32>
    %49 = vector.shape_cast %48 : vector<64xf32> to vector<1x64xf32>
    %50 = vector.extract_strided_slice %49 {offsets = [0, 0], sizes = [1, 4], strides = [1, 1]} : vector<1x64xf32> to vector<1x4xf32>
    %51 = vector.extract_strided_slice %49 {offsets = [0, 4], sizes = [1, 4], strides = [1, 1]} : vector<1x64xf32> to vector<1x4xf32>
    %52 = arith.addf %50, %51 : vector<1x4xf32>
    %53 = vector.extract_strided_slice %49 {offsets = [0, 8], sizes = [1, 4], strides = [1, 1]} : vector<1x64xf32> to vector<1x4xf32>
    %54 = arith.addf %52, %53 : vector<1x4xf32>
    %55 = vector.extract_strided_slice %49 {offsets = [0, 12], sizes = [1, 4], strides = [1, 1]} : vector<1x64xf32> to vector<1x4xf32>
    %56 = arith.addf %54, %55 : vector<1x4xf32>
    %57 = vector.extract_strided_slice %49 {offsets = [0, 16], sizes = [1, 4], strides = [1, 1]} : vector<1x64xf32> to vector<1x4xf32>
    %58 = arith.addf %56, %57 : vector<1x4xf32>
    %59 = vector.extract_strided_slice %49 {offsets = [0, 20], sizes = [1, 4], strides = [1, 1]} : vector<1x64xf32> to vector<1x4xf32>
    %60 = arith.addf %58, %59 : vector<1x4xf32>
    %61 = vector.extract_strided_slice %49 {offsets = [0, 24], sizes = [1, 4], strides = [1, 1]} : vector<1x64xf32> to vector<1x4xf32>
    %62 = arith.addf %60, %61 : vector<1x4xf32>
    %63 = vector.extract_strided_slice %49 {offsets = [0, 28], sizes = [1, 4], strides = [1, 1]} : vector<1x64xf32> to vector<1x4xf32>
    %64 = arith.addf %62, %63 : vector<1x4xf32>
    %65 = vector.extract_strided_slice %49 {offsets = [0, 32], sizes = [1, 4], strides = [1, 1]} : vector<1x64xf32> to vector<1x4xf32>
    %66 = arith.addf %64, %65 : vector<1x4xf32>
    %67 = vector.extract_strided_slice %49 {offsets = [0, 36], sizes = [1, 4], strides = [1, 1]} : vector<1x64xf32> to vector<1x4xf32>
    %68 = arith.addf %66, %67 : vector<1x4xf32>
    %69 = vector.extract_strided_slice %49 {offsets = [0, 40], sizes = [1, 4], strides = [1, 1]} : vector<1x64xf32> to vector<1x4xf32>
    %70 = arith.addf %68, %69 : vector<1x4xf32>
    %71 = vector.extract_strided_slice %49 {offsets = [0, 44], sizes = [1, 4], strides = [1, 1]} : vector<1x64xf32> to vector<1x4xf32>
    %72 = arith.addf %70, %71 : vector<1x4xf32>
    %73 = vector.extract_strided_slice %49 {offsets = [0, 48], sizes = [1, 4], strides = [1, 1]} : vector<1x64xf32> to vector<1x4xf32>
    %74 = arith.addf %72, %73 : vector<1x4xf32>
    %75 = vector.extract_strided_slice %49 {offsets = [0, 52], sizes = [1, 4], strides = [1, 1]} : vector<1x64xf32> to vector<1x4xf32>
    %76 = arith.addf %74, %75 : vector<1x4xf32>
    %77 = vector.extract_strided_slice %49 {offsets = [0, 56], sizes = [1, 4], strides = [1, 1]} : vector<1x64xf32> to vector<1x4xf32>
    %78 = arith.addf %76, %77 : vector<1x4xf32>
    %79 = vector.extract_strided_slice %49 {offsets = [0, 60], sizes = [1, 4], strides = [1, 1]} : vector<1x64xf32> to vector<1x4xf32>
    %80 = arith.addf %78, %79 : vector<1x4xf32>
    %cst_48 = arith.constant 0.001953125 : f32
    %81 = vector.broadcast %cst_48 : f32 to vector<1x4xf32>
    %82 = arith.mulf %80, %81 : vector<1x4xf32>
    %83 = tpu.concatenate %82, %82, %82, %82, %82, %82, %82, %82, %82, %82, %82, %82, %82, %82, %82, %82 in 1 : vector<1x4xf32>, vector<1x4xf32>, vector<1x4xf32>, vector<1x4xf32>, vector<1x4xf32>, vector<1x4xf32>, vector<1x4xf32>, vector<1x4xf32>, vector<1x4xf32>, vector<1x4xf32>, vector<1x4xf32>, vector<1x4xf32>, vector<1x4xf32>, vector<1x4xf32>, vector<1x4xf32>, vector<1x4xf32> -> vector<1x64xf32>
    %84 = vector.broadcast %83 : vector<1x64xf32> to vector<32x64xf32>
    %85 = arith.subf %47, %84 : vector<32x64xf32>
    %86 = arith.mulf %85, %85 : vector<32x64xf32>
    %cst_49 = arith.constant dense<0.000000e+00> : vector<64xf32>
    %87 = vector.multi_reduction <add>, %86, %cst_49 [0] : vector<32x64xf32> to vector<64xf32>
    %88 = vector.shape_cast %87 : vector<64xf32> to vector<1x64xf32>
    %89 = vector.extract_strided_slice %88 {offsets = [0, 0], sizes = [1, 4], strides = [1, 1]} : vector<1x64xf32> to vector<1x4xf32>
    %90 = vector.extract_strided_slice %88 {offsets = [0, 4], sizes = [1, 4], strides = [1, 1]} : vector<1x64xf32> to vector<1x4xf32>
    %91 = arith.addf %89, %90 : vector<1x4xf32>
    %92 = vector.extract_strided_slice %88 {offsets = [0, 8], sizes = [1, 4], strides = [1, 1]} : vector<1x64xf32> to vector<1x4xf32>
    %93 = arith.addf %91, %92 : vector<1x4xf32>
    %94 = vector.extract_strided_slice %88 {offsets = [0, 12], sizes = [1, 4], strides = [1, 1]} : vector<1x64xf32> to vector<1x4xf32>
    %95 = arith.addf %93, %94 : vector<1x4xf32>
    %96 = vector.extract_strided_slice %88 {offsets = [0, 16], sizes = [1, 4], strides = [1, 1]} : vector<1x64xf32> to vector<1x4xf32>
    %97 = arith.addf %95, %96 : vector<1x4xf32>
    %98 = vector.extract_strided_slice %88 {offsets = [0, 20], sizes = [1, 4], strides = [1, 1]} : vector<1x64xf32> to vector<1x4xf32>
    %99 = arith.addf %97, %98 : vector<1x4xf32>
    %100 = vector.extract_strided_slice %88 {offsets = [0, 24], sizes = [1, 4], strides = [1, 1]} : vector<1x64xf32> to vector<1x4xf32>
    %101 = arith.addf %99, %100 : vector<1x4xf32>
    %102 = vector.extract_strided_slice %88 {offsets = [0, 28], sizes = [1, 4], strides = [1, 1]} : vector<1x64xf32> to vector<1x4xf32>
    %103 = arith.addf %101, %102 : vector<1x4xf32>
    %104 = vector.extract_strided_slice %88 {offsets = [0, 32], sizes = [1, 4], strides = [1, 1]} : vector<1x64xf32> to vector<1x4xf32>
    %105 = arith.addf %103, %104 : vector<1x4xf32>
    %106 = vector.extract_strided_slice %88 {offsets = [0, 36], sizes = [1, 4], strides = [1, 1]} : vector<1x64xf32> to vector<1x4xf32>
    %107 = arith.addf %105, %106 : vector<1x4xf32>
    %108 = vector.extract_strided_slice %88 {offsets = [0, 40], sizes = [1, 4], strides = [1, 1]} : vector<1x64xf32> to vector<1x4xf32>
    %109 = arith.addf %107, %108 : vector<1x4xf32>
    %110 = vector.extract_strided_slice %88 {offsets = [0, 44], sizes = [1, 4], strides = [1, 1]} : vector<1x64xf32> to vector<1x4xf32>
    %111 = arith.addf %109, %110 : vector<1x4xf32>
    %112 = vector.extract_strided_slice %88 {offsets = [0, 48], sizes = [1, 4], strides = [1, 1]} : vector<1x64xf32> to vector<1x4xf32>
    %113 = arith.addf %111, %112 : vector<1x4xf32>
    %114 = vector.extract_strided_slice %88 {offsets = [0, 52], sizes = [1, 4], strides = [1, 1]} : vector<1x64xf32> to vector<1x4xf32>
    %115 = arith.addf %113, %114 : vector<1x4xf32>
    %116 = vector.extract_strided_slice %88 {offsets = [0, 56], sizes = [1, 4], strides = [1, 1]} : vector<1x64xf32> to vector<1x4xf32>
    %117 = arith.addf %115, %116 : vector<1x4xf32>
    %118 = vector.extract_strided_slice %88 {offsets = [0, 60], sizes = [1, 4], strides = [1, 1]} : vector<1x64xf32> to vector<1x4xf32>
    %119 = arith.addf %117, %118 : vector<1x4xf32>
    %cst_50 = arith.constant 0.001953125 : f32
    %120 = vector.broadcast %cst_50 : f32 to vector<1x4xf32>
    %121 = arith.mulf %119, %120 : vector<1x4xf32>
    %122 = tpu.concatenate %121, %121, %121, %121, %121, %121, %121, %121, %121, %121, %121, %121, %121, %121, %121, %121 in 1 : vector<1x4xf32>, vector<1x4xf32>, vector<1x4xf32>, vector<1x4xf32>, vector<1x4xf32>, vector<1x4xf32>, vector<1x4xf32>, vector<1x4xf32>, vector<1x4xf32>, vector<1x4xf32>, vector<1x4xf32>, vector<1x4xf32>, vector<1x4xf32>, vector<1x4xf32>, vector<1x4xf32>, vector<1x4xf32> -> vector<1x64xf32>
    %cst_51 = arith.constant 9.99999974E-6 : f32
    %123 = vector.broadcast %cst_51 : f32 to vector<1x64xf32>
    %124 = arith.addf %122, %123 : vector<1x64xf32>
    %125 = math.rsqrt %124 : vector<1x64xf32>
    %126 = arith.mulf %4, %125 : vector<1x64xf32>
    %127 = vector.broadcast %126 : vector<1x64xf32> to vector<32x64xf32>
    %128 = arith.mulf %85, %127 : vector<32x64xf32>
    %129 = vector.broadcast %5 : vector<1x64xf32> to vector<32x64xf32>
    %130 = arith.addf %128, %129 : vector<32x64xf32>
    %cst_52 = arith.constant 0.000000e+00 : f32
    %131 = vector.broadcast %cst_52 : f32 to vector<32x64xf32>
    %132 = arith.maximumf %130, %131 : vector<32x64xf32>
    %133 = vector.extract_strided_slice %132 {offsets = [0, 0], sizes = [16, 64], strides = [1, 1]} : vector<32x64xf32> to vector<16x64xf32>
    %c0_53 = arith.constant 0 : index
    %c1_54 = arith.constant 1 : index
    %c4_55 = arith.constant 4 : index
    %134 = vector.load %arg6[%c0_53, %c1_54, %c4_55] : memref<2x18x72xf32, #tpu.memory_space<vmem>>, vector<1x16x64xf32>
    %135 = vector.shape_cast %134 : vector<1x16x64xf32> to vector<16x64xf32>
    %136 = vector.shape_cast %133 : vector<16x64xf32> to vector<1x16x64xf32>
    tpu.vector_store %arg6[%c0_53, %c1_54, %c4_55], %136 {strides = array<i32>} : memref<2x18x72xf32, #tpu.memory_space<vmem>>, vector<1x16x64xf32>,
    %137 = vector.extract_strided_slice %132 {offsets = [16, 0], sizes = [16, 64], strides = [1, 1]} : vector<32x64xf32> to vector<16x64xf32>
    %c1_56 = arith.constant 1 : index
    %c1_57 = arith.constant 1 : index
    %c4_58 = arith.constant 4 : index
    %138 = vector.load %arg6[%c1_56, %c1_57, %c4_58] : memref<2x18x72xf32, #tpu.memory_space<vmem>>, vector<1x16x64xf32>
    %139 = vector.shape_cast %138 : vector<1x16x64xf32> to vector<16x64xf32>
    %140 = vector.shape_cast %137 : vector<16x64xf32> to vector<1x16x64xf32>
    tpu.vector_store %arg6[%c1_56, %c1_57, %c4_58], %140 {strides = array<i32>} : memref<2x18x72xf32, #tpu.memory_space<vmem>>, vector<1x16x64xf32>,
    %c0_59 = arith.constant 0 : index
    %c0_60 = arith.constant 0 : index
    %c0_61 = arith.constant 0 : index
    %141 = vector.load %arg6[%c0_59, %c0_60, %c0_61] : memref<2x18x72xf32, #tpu.memory_space<vmem>>, vector<1x16x72xf32>
    %142 = vector.shape_cast %141 : vector<1x16x72xf32> to vector<16x72xf32>
    %c1_62 = arith.constant 1 : index
    %c0_63 = arith.constant 0 : index
    %c0_64 = arith.constant 0 : index
    %143 = vector.load %arg6[%c1_62, %c0_63, %c0_64] : memref<2x18x72xf32, #tpu.memory_space<vmem>>, vector<1x16x72xf32>
    %144 = vector.shape_cast %143 : vector<1x16x72xf32> to vector<16x72xf32>
    %145 = tpu.concatenate %142, %144 in 0 : vector<16x72xf32>, vector<16x72xf32> -> vector<32x72xf32>
    %146 = arith.truncf %145 : vector<32x72xf32> to vector<32x72xbf16>
    %c0_65 = arith.constant 0 : index
    %c0_66 = arith.constant 0 : index
    %c0_67 = arith.constant 0 : index
    %147 = vector.load %arg3[%c0_65, %c0_66, %c0_67] : memref<3x72x64xbf16, #tpu.memory_space<vmem>>, vector<1x72x64xbf16>
    %148 = vector.shape_cast %147 : vector<1x72x64xbf16> to vector<72x64xbf16>
    %cst_68 = arith.constant dense<0.000000e+00> : vector<32x64xf32>
    %149 = tpu.matmul %146, %148, %cst_68 {dimension_numbers = #tpu.dot_dimension_numbers<[1], [0], [0], [1], [0, 0, 1, 1], [], []>} : vector<32x72xbf16>, vector<72x64xbf16>, vector<32x64xf32> -> vector<32x64xf32>
    %c0_69 = arith.constant 0 : index
    %c1_70 = arith.constant 1 : index
    %c0_71 = arith.constant 0 : index
    %150 = vector.load %arg6[%c0_69, %c1_70, %c0_71] : memref<2x18x72xf32, #tpu.memory_space<vmem>>, vector<1x16x72xf32>
    %151 = vector.shape_cast %150 : vector<1x16x72xf32> to vector<16x72xf32>
    %c1_72 = arith.constant 1 : index
    %c1_73 = arith.constant 1 : index
    %c0_74 = arith.constant 0 : index
    %152 = vector.load %arg6[%c1_72, %c1_73, %c0_74] : memref<2x18x72xf32, #tpu.memory_space<vmem>>, vector<1x16x72xf32>
    %153 = vector.shape_cast %152 : vector<1x16x72xf32> to vector<16x72xf32>
    %154 = tpu.concatenate %151, %153 in 0 : vector<16x72xf32>, vector<16x72xf32> -> vector<32x72xf32>
    %155 = arith.truncf %154 : vector<32x72xf32> to vector<32x72xbf16>
    %c1_75 = arith.constant 1 : index
    %c0_76 = arith.constant 0 : index
    %c0_77 = arith.constant 0 : index
    %156 = vector.load %arg3[%c1_75, %c0_76, %c0_77] : memref<3x72x64xbf16, #tpu.memory_space<vmem>>, vector<1x72x64xbf16>
    %157 = vector.shape_cast %156 : vector<1x72x64xbf16> to vector<72x64xbf16>
    %cst_78 = arith.constant dense<0.000000e+00> : vector<32x64xf32>
    %158 = tpu.matmul %155, %157, %cst_78 {dimension_numbers = #tpu.dot_dimension_numbers<[1], [0], [0], [1], [0, 0, 1, 1], [], []>} : vector<32x72xbf16>, vector<72x64xbf16>, vector<32x64xf32> -> vector<32x64xf32>
    %159 = arith.addf %149, %158 : vector<32x64xf32>
    %c0_79 = arith.constant 0 : index
    %c2_80 = arith.constant 2 : index
    %c0_81 = arith.constant 0 : index
    %160 = vector.load %arg6[%c0_79, %c2_80, %c0_81] : memref<2x18x72xf32, #tpu.memory_space<vmem>>, vector<1x16x72xf32>
    %161 = vector.shape_cast %160 : vector<1x16x72xf32> to vector<16x72xf32>
    %c1_82 = arith.constant 1 : index
    %c2_83 = arith.constant 2 : index
    %c0_84 = arith.constant 0 : index
    %162 = vector.load %arg6[%c1_82, %c2_83, %c0_84] : memref<2x18x72xf32, #tpu.memory_space<vmem>>, vector<1x16x72xf32>
    %163 = vector.shape_cast %162 : vector<1x16x72xf32> to vector<16x72xf32>
    %164 = tpu.concatenate %161, %163 in 0 : vector<16x72xf32>, vector<16x72xf32> -> vector<32x72xf32>
    %165 = arith.truncf %164 : vector<32x72xf32> to vector<32x72xbf16>
    %c2_85 = arith.constant 2 : index
    %c0_86 = arith.constant 0 : index
    %c0_87 = arith.constant 0 : index
    %166 = vector.load %arg3[%c2_85, %c0_86, %c0_87] : memref<3x72x64xbf16, #tpu.memory_space<vmem>>, vector<1x72x64xbf16>
    %167 = vector.shape_cast %166 : vector<1x72x64xbf16> to vector<72x64xbf16>
    %cst_88 = arith.constant dense<0.000000e+00> : vector<32x64xf32>
    %168 = tpu.matmul %165, %167, %cst_88 {dimension_numbers = #tpu.dot_dimension_numbers<[1], [0], [0], [1], [0, 0, 1, 1], [], []>} : vector<32x72xbf16>, vector<72x64xbf16>, vector<32x64xf32> -> vector<32x64xf32>
    %169 = arith.addf %159, %168 : vector<32x64xf32>
    %170 = vector.broadcast %6 : vector<1x64xf32> to vector<32x64xf32>
    %171 = arith.addf %169, %170 : vector<32x64xf32>
    %cst_89 = arith.constant dense<0.000000e+00> : vector<64xf32>
    %172 = vector.multi_reduction <add>, %171, %cst_89 [0] : vector<32x64xf32> to vector<64xf32>
    %173 = vector.shape_cast %172 : vector<64xf32> to vector<1x64xf32>
    %174 = vector.extract_strided_slice %173 {offsets = [0, 0], sizes = [1, 4], strides = [1, 1]} : vector<1x64xf32> to vector<1x4xf32>
    %175 = vector.extract_strided_slice %173 {offsets = [0, 4], sizes = [1, 4], strides = [1, 1]} : vector<1x64xf32> to vector<1x4xf32>
    %176 = arith.addf %174, %175 : vector<1x4xf32>
    %177 = vector.extract_strided_slice %173 {offsets = [0, 8], sizes = [1, 4], strides = [1, 1]} : vector<1x64xf32> to vector<1x4xf32>
    %178 = arith.addf %176, %177 : vector<1x4xf32>
    %179 = vector.extract_strided_slice %173 {offsets = [0, 12], sizes = [1, 4], strides = [1, 1]} : vector<1x64xf32> to vector<1x4xf32>
    %180 = arith.addf %178, %179 : vector<1x4xf32>
    %181 = vector.extract_strided_slice %173 {offsets = [0, 16], sizes = [1, 4], strides = [1, 1]} : vector<1x64xf32> to vector<1x4xf32>
    %182 = arith.addf %180, %181 : vector<1x4xf32>
    %183 = vector.extract_strided_slice %173 {offsets = [0, 20], sizes = [1, 4], strides = [1, 1]} : vector<1x64xf32> to vector<1x4xf32>
    %184 = arith.addf %182, %183 : vector<1x4xf32>
    %185 = vector.extract_strided_slice %173 {offsets = [0, 24], sizes = [1, 4], strides = [1, 1]} : vector<1x64xf32> to vector<1x4xf32>
    %186 = arith.addf %184, %185 : vector<1x4xf32>
    %187 = vector.extract_strided_slice %173 {offsets = [0, 28], sizes = [1, 4], strides = [1, 1]} : vector<1x64xf32> to vector<1x4xf32>
    %188 = arith.addf %186, %187 : vector<1x4xf32>
    %189 = vector.extract_strided_slice %173 {offsets = [0, 32], sizes = [1, 4], strides = [1, 1]} : vector<1x64xf32> to vector<1x4xf32>
    %190 = arith.addf %188, %189 : vector<1x4xf32>
    %191 = vector.extract_strided_slice %173 {offsets = [0, 36], sizes = [1, 4], strides = [1, 1]} : vector<1x64xf32> to vector<1x4xf32>
    %192 = arith.addf %190, %191 : vector<1x4xf32>
    %193 = vector.extract_strided_slice %173 {offsets = [0, 40], sizes = [1, 4], strides = [1, 1]} : vector<1x64xf32> to vector<1x4xf32>
    %194 = arith.addf %192, %193 : vector<1x4xf32>
    %195 = vector.extract_strided_slice %173 {offsets = [0, 44], sizes = [1, 4], strides = [1, 1]} : vector<1x64xf32> to vector<1x4xf32>
    %196 = arith.addf %194, %195 : vector<1x4xf32>
    %197 = vector.extract_strided_slice %173 {offsets = [0, 48], sizes = [1, 4], strides = [1, 1]} : vector<1x64xf32> to vector<1x4xf32>
    %198 = arith.addf %196, %197 : vector<1x4xf32>
    %199 = vector.extract_strided_slice %173 {offsets = [0, 52], sizes = [1, 4], strides = [1, 1]} : vector<1x64xf32> to vector<1x4xf32>
    %200 = arith.addf %198, %199 : vector<1x4xf32>
    %201 = vector.extract_strided_slice %173 {offsets = [0, 56], sizes = [1, 4], strides = [1, 1]} : vector<1x64xf32> to vector<1x4xf32>
    %202 = arith.addf %200, %201 : vector<1x4xf32>
    %203 = vector.extract_strided_slice %173 {offsets = [0, 60], sizes = [1, 4], strides = [1, 1]} : vector<1x64xf32> to vector<1x4xf32>
    %204 = arith.addf %202, %203 : vector<1x4xf32>
    %cst_90 = arith.constant 0.001953125 : f32
    %205 = vector.broadcast %cst_90 : f32 to vector<1x4xf32>
    %206 = arith.mulf %204, %205 : vector<1x4xf32>
    %207 = tpu.concatenate %206, %206, %206, %206, %206, %206, %206, %206, %206, %206, %206, %206, %206, %206, %206, %206 in 1 : vector<1x4xf32>, vector<1x4xf32>, vector<1x4xf32>, vector<1x4xf32>, vector<1x4xf32>, vector<1x4xf32>, vector<1x4xf32>, vector<1x4xf32>, vector<1x4xf32>, vector<1x4xf32>, vector<1x4xf32>, vector<1x4xf32>, vector<1x4xf32>, vector<1x4xf32>, vector<1x4xf32>, vector<1x4xf32> -> vector<1x64xf32>
    %208 = vector.broadcast %207 : vector<1x64xf32> to vector<32x64xf32>
    %209 = arith.subf %171, %208 : vector<32x64xf32>
    %210 = arith.mulf %209, %209 : vector<32x64xf32>
    %cst_91 = arith.constant dense<0.000000e+00> : vector<64xf32>
    %211 = vector.multi_reduction <add>, %210, %cst_91 [0] : vector<32x64xf32> to vector<64xf32>
    %212 = vector.shape_cast %211 : vector<64xf32> to vector<1x64xf32>
    %213 = vector.extract_strided_slice %212 {offsets = [0, 0], sizes = [1, 4], strides = [1, 1]} : vector<1x64xf32> to vector<1x4xf32>
    %214 = vector.extract_strided_slice %212 {offsets = [0, 4], sizes = [1, 4], strides = [1, 1]} : vector<1x64xf32> to vector<1x4xf32>
    %215 = arith.addf %213, %214 : vector<1x4xf32>
    %216 = vector.extract_strided_slice %212 {offsets = [0, 8], sizes = [1, 4], strides = [1, 1]} : vector<1x64xf32> to vector<1x4xf32>
    %217 = arith.addf %215, %216 : vector<1x4xf32>
    %218 = vector.extract_strided_slice %212 {offsets = [0, 12], sizes = [1, 4], strides = [1, 1]} : vector<1x64xf32> to vector<1x4xf32>
    %219 = arith.addf %217, %218 : vector<1x4xf32>
    %220 = vector.extract_strided_slice %212 {offsets = [0, 16], sizes = [1, 4], strides = [1, 1]} : vector<1x64xf32> to vector<1x4xf32>
    %221 = arith.addf %219, %220 : vector<1x4xf32>
    %222 = vector.extract_strided_slice %212 {offsets = [0, 20], sizes = [1, 4], strides = [1, 1]} : vector<1x64xf32> to vector<1x4xf32>
    %223 = arith.addf %221, %222 : vector<1x4xf32>
    %224 = vector.extract_strided_slice %212 {offsets = [0, 24], sizes = [1, 4], strides = [1, 1]} : vector<1x64xf32> to vector<1x4xf32>
    %225 = arith.addf %223, %224 : vector<1x4xf32>
    %226 = vector.extract_strided_slice %212 {offsets = [0, 28], sizes = [1, 4], strides = [1, 1]} : vector<1x64xf32> to vector<1x4xf32>
    %227 = arith.addf %225, %226 : vector<1x4xf32>
    %228 = vector.extract_strided_slice %212 {offsets = [0, 32], sizes = [1, 4], strides = [1, 1]} : vector<1x64xf32> to vector<1x4xf32>
    %229 = arith.addf %227, %228 : vector<1x4xf32>
    %230 = vector.extract_strided_slice %212 {offsets = [0, 36], sizes = [1, 4], strides = [1, 1]} : vector<1x64xf32> to vector<1x4xf32>
    %231 = arith.addf %229, %230 : vector<1x4xf32>
    %232 = vector.extract_strided_slice %212 {offsets = [0, 40], sizes = [1, 4], strides = [1, 1]} : vector<1x64xf32> to vector<1x4xf32>
    %233 = arith.addf %231, %232 : vector<1x4xf32>
    %234 = vector.extract_strided_slice %212 {offsets = [0, 44], sizes = [1, 4], strides = [1, 1]} : vector<1x64xf32> to vector<1x4xf32>
    %235 = arith.addf %233, %234 : vector<1x4xf32>
    %236 = vector.extract_strided_slice %212 {offsets = [0, 48], sizes = [1, 4], strides = [1, 1]} : vector<1x64xf32> to vector<1x4xf32>
    %237 = arith.addf %235, %236 : vector<1x4xf32>
    %238 = vector.extract_strided_slice %212 {offsets = [0, 52], sizes = [1, 4], strides = [1, 1]} : vector<1x64xf32> to vector<1x4xf32>
    %239 = arith.addf %237, %238 : vector<1x4xf32>
    %240 = vector.extract_strided_slice %212 {offsets = [0, 56], sizes = [1, 4], strides = [1, 1]} : vector<1x64xf32> to vector<1x4xf32>
    %241 = arith.addf %239, %240 : vector<1x4xf32>
    %242 = vector.extract_strided_slice %212 {offsets = [0, 60], sizes = [1, 4], strides = [1, 1]} : vector<1x64xf32> to vector<1x4xf32>
    %243 = arith.addf %241, %242 : vector<1x4xf32>
    %cst_92 = arith.constant 0.001953125 : f32
    %244 = vector.broadcast %cst_92 : f32 to vector<1x4xf32>
    %245 = arith.mulf %243, %244 : vector<1x4xf32>
    %246 = tpu.concatenate %245, %245, %245, %245, %245, %245, %245, %245, %245, %245, %245, %245, %245, %245, %245, %245 in 1 : vector<1x4xf32>, vector<1x4xf32>, vector<1x4xf32>, vector<1x4xf32>, vector<1x4xf32>, vector<1x4xf32>, vector<1x4xf32>, vector<1x4xf32>, vector<1x4xf32>, vector<1x4xf32>, vector<1x4xf32>, vector<1x4xf32>, vector<1x4xf32>, vector<1x4xf32>, vector<1x4xf32>, vector<1x4xf32> -> vector<1x64xf32>
    %cst_93 = arith.constant 9.99999974E-6 : f32
    %247 = vector.broadcast %cst_93 : f32 to vector<1x64xf32>
    %248 = arith.addf %246, %247 : vector<1x64xf32>
    %249 = math.rsqrt %248 : vector<1x64xf32>
    %250 = arith.mulf %7, %249 : vector<1x64xf32>
    %251 = vector.broadcast %250 : vector<1x64xf32> to vector<32x64xf32>
    %252 = arith.mulf %209, %251 : vector<32x64xf32>
    %253 = vector.broadcast %8 : vector<1x64xf32> to vector<32x64xf32>
    %254 = arith.addf %252, %253 : vector<32x64xf32>
    %255 = arith.addf %254, %2 : vector<32x64xf32>
    %cst_94 = arith.constant 0.000000e+00 : f32
    %256 = vector.broadcast %cst_94 : f32 to vector<32x64xf32>
    %257 = arith.maximumf %255, %256 : vector<32x64xf32>
    %c0_95 = arith.constant 0 : index
    %c0_96 = arith.constant 0 : index
    %258 = vector.load %arg5[%c0_95, %c0_96] : memref<32x64xf32, #tpu.memory_space<vmem>>, vector<32x64xf32>
    tpu.vector_store %arg5[%c0_95, %c0_96], %257 {strides = array<i32>} : memref<32x64xf32, #tpu.memory_space<vmem>>, vector<32x64xf32>,
    return
  }
  func.func @transform_0(%arg0: i32) -> (i32, i32) {
    %c0_i32 = arith.constant 0 : i32
    %c0_i32_0 = arith.constant 0 : i32
    %c0_i32_1 = arith.constant 0 : i32
    return %c0_i32, %c0_i32_0 : i32, i32
  }
  func.func @transform_1(%arg0: i32) -> (i32, i32, i32) {
    %c0_i32 = arith.constant 0 : i32
    %c0_i32_0 = arith.constant 0 : i32
    %c0_i32_1 = arith.constant 0 : i32
    %c0_i32_2 = arith.constant 0 : i32
    return %c0_i32, %c0_i32_0, %c0_i32_1 : i32, i32, i32
  }
  func.func @transform_2(%arg0: i32) -> (i32, i32, i32) {
    %c0_i32 = arith.constant 0 : i32
    %c0_i32_0 = arith.constant 0 : i32
    %c0_i32_1 = arith.constant 0 : i32
    %c0_i32_2 = arith.constant 0 : i32
    return %c0_i32, %c0_i32_0, %c0_i32_1 : i32, i32, i32
  }
  func.func @transform_3(%arg0: i32) -> (i32, i32) {
    %c0_i32 = arith.constant 0 : i32
    %c0_i32_0 = arith.constant 0 : i32
    %c0_i32_1 = arith.constant 0 : i32
    return %c0_i32, %c0_i32_0 : i32, i32
  }
  func.func @transform_4(%arg0: i32) -> (i32, i32) {
    %c0_i32 = arith.constant 0 : i32
    %c0_i32_0 = arith.constant 0 : i32
    %c0_i32_1 = arith.constant 0 : i32
    return %c0_i32, %c0_i32_0 : i32, i32
  }
}

</mosaic_0001>

<llo_original>
// kernel: tile.33
$region0: #{tile.33}
  #allocation0 [shape = 's32[1]{0}', space=sflag, size = 0x4, scoped, tag = 'scoped memory for tile.33']
  %s0 = inlined_call_operand.vmem [shape: f32[4], index: 0, kind: input, shape index: {}]
  %s1 = inlined_call_operand.vmem [shape: f32[16,4], index: 1, kind: output, shape index: {}]
  // Predicated region
  $region2: #{tile.33} parent=0 // pred_check
    _
  $region3: #{tile.33} parent=0 // pred_check_branch
    %3 = sbr.rel (0) target = $region5
  $region4: #{tile.33} parent=0 // pred_region
    _
  $region5: #{tile.33} parent=0 // pred_fallthru
    _
  %v4 = vld [vmem:[%s0] ss:$0 sm:$0xff]
  %5 = vst [vmem:[%s1] sm:$0xff] %v4
  %s6 = scalar_lea.vmem %s1, 8
  %7 = vst [vmem:[%s6] sm:$0xff] %v4

// kernel: tile.54
$region0: #{tile.54}
  %s0 = inlined_call_operand.vmem [shape: f32[16,4], index: 0, kind: input, shape index: {}]
  %s1 = inlined_call_operand.vmem [shape: f32[1,64], index: 1, kind: output, shape index: {}]
  $region1: #{tile.54} parent=0
    #allocation0 [shape = 'u8[4096]{0}', space=vmem, size = 0x1000, scoped, tag = 'scoped mem for output reshape']
    %v2 = vld [vmem:[%s0] sm:$0x1]
    %vm3 = vcmask 31744
    %4 = vst.msk [vmem:[#allocation0] sm:$0x1] %vm3, %v2
    %s5 = scalar_lea.vmem %s0, 15
    %v6 = vld [vmem:[%s5] sm:$0x1]
    %7 = vrot.lane.b32.xlu0 %v6, 60
    %v8 = vpop.permute.xlu0 %7
    %vm9 = vcmask 523744
    %10 = vst.msk [vmem:[#allocation0] sm:$0x1] %vm9, %v8
    %s11 = scalar_lea.vmem %s0, 14
    %v12 = vld [vmem:[%s11] sm:$0x1]
    %13 = vrot.lane.b32.xlu0 %v12, 56
    %v14 = vpop.permute.xlu0 %13
    %vm15 = vcmask 490944
    %16 = vst.msk [vmem:[#allocation0] sm:$0x1] %vm15, %v14
    %s17 = scalar_lea.vmem %s0, 13
    %v18 = vld [vmem:[%s17] sm:$0x1]
    %19 = vrot.lane.b32.xlu0 %v18, 52
    %v20 = vpop.permute.xlu0 %19
    %vm21 = vcmask 458144
    %22 = vst.msk [vmem:[#allocation0] sm:$0x1] %vm21, %v20
    %s23 = scalar_lea.vmem %s0, 12
    %v24 = vld [vmem:[%s23] sm:$0x1]
    %25 = vrot.lane.b32.xlu0 %v24, 48
    %v26 = vpop.permute.xlu0 %25
    %vm27 = vcmask 425344
    %28 = vst.msk [vmem:[#allocation0] sm:$0x1] %vm27, %v26
    %s29 = scalar_lea.vmem %s0, 11
    %v30 = vld [vmem:[%s29] sm:$0x1]
    %31 = vrot.lane.b32.xlu0 %v30, 44
    %v32 = vpop.permute.xlu0 %31
    %vm33 = vcmask 392544
    %34 = vst.msk [vmem:[#allocation0] sm:$0x1] %vm33, %v32
    %s35 = scalar_lea.vmem %s0, 10
    %v36 = vld [vmem:[%s35] sm:$0x1]
    %37 = vrot.lane.b32.xlu0 %v36, 40
    %v38 = vpop.permute.xlu0 %37
    %vm39 = vcmask 359744
    %40 = vst.msk [vmem:[#allocation0] sm:$0x1] %vm39, %v38
    %s41 = scalar_lea.vmem %s0, 9
    %v42 = vld [vmem:[%s41] sm:$0x1]
    %43 = vrot.lane.b32.xlu0 %v42, 36
    %v44 = vpop.permute.xlu0 %43
    %vm45 = vcmask 326944
    %46 = vst.msk [vmem:[#allocation0] sm:$0x1] %vm45, %v44
    %s47 = scalar_lea.vmem %s0, 8
    %v48 = vld [vmem:[%s47] sm:$0x1]
    %49 = vrot.lane.b32.xlu0 %v48, 32
    %v50 = vpop.permute.xlu0 %49
    %vm51 = vcmask 294144
    %52 = vst.msk [vmem:[#allocation0] sm:$0x1] %vm51, %v50
    %s53 = scalar_lea.vmem %s0, 7
    %v54 = vld [vmem:[%s53] sm:$0x1]
    %55 = vrot.lane.b32.xlu0 %v54, 28
    %v56 = vpop.permute.xlu0 %55
    %vm57 = vcmask 261344
    %58 = vst.msk [vmem:[#allocation0] sm:$0x1] %vm57, %v56
    %s59 = scalar_lea.vmem %s0, 6
    %v60 = vld [vmem:[%s59] sm:$0x1]
    %61 = vrot.lane.b32.xlu0 %v60, 24
    %v62 = vpop.permute.xlu0 %61
    %vm63 = vcmask 228544
    %64 = vst.msk [vmem:[#allocation0] sm:$0x1] %vm63, %v62
    %s65 = scalar_lea.vmem %s0, 5
    %v66 = vld [vmem:[%s65] sm:$0x1]
    %67 = vrot.lane.b32.xlu0 %v66, 20
    %v68 = vpop.permute.xlu0 %67
    %vm69 = vcmask 195744
    %70 = vst.msk [vmem:[#allocation0] sm:$0x1] %vm69, %v68
    %s71 = scalar_lea.vmem %s0, 4
    %v72 = vld [vmem:[%s71] sm:$0x1]
    %73 = vrot.lane.b32.xlu0 %v72, 16
    %v74 = vpop.permute.xlu0 %73
    %vm75 = vcmask 162944
    %76 = vst.msk [vmem:[#allocation0] sm:$0x1] %vm75, %v74
    %s77 = scalar_lea.vmem %s0, 3
    %v78 = vld [vmem:[%s77] sm:$0x1]
    %79 = vrot.lane.b32.xlu0 %v78, 12
    %v80 = vpop.permute.xlu0 %79
    %vm81 = vcmask 130144
    %82 = vst.msk [vmem:[#allocation0] sm:$0x1] %vm81, %v80
    %s83 = scalar_lea.vmem %s0, 2
    %v84 = vld [vmem:[%s83] sm:$0x1]
    %85 = vrot.lane.b32.xlu0 %v84, 8
    %v86 = vpop.permute.xlu0 %85
    %vm87 = vcmask 97344
    %88 = vst.msk [vmem:[#allocation0] sm:$0x1] %vm87, %v86
    %s89 = scalar_lea.vmem %s0, 1
    %v90 = vld [vmem:[%s89] sm:$0x1]
    %91 = vrot.lane.b32.xlu0 %v90, 4
    %v92 = vpop.permute.xlu0 %91
    %vm93 = vcmask 64544
    %94 = vst.msk [vmem:[#allocation0] sm:$0x1] %vm93, %v92
    %s96 = sshll.u32 1, 1
    %s97 = ssub.s32 %s96, 1
    %v99 = vld [vmem:[#allocation0] sm:%s97]
    %s100 = sshll.u32 1, 1
    %s101 = ssub.s32 %s100, 1
    %102 = vst [vmem:[%s1] sm:%s101] %v99

// kernel: residual_block.1
$region0: #{residual_block.1}
  #allocation0 [shape = 'u32[]', space=smem, size = 0x4, offset = 0x4, fixed_abs, tag = 'smem constant byte address 0x4 - core index']
  #allocation1 [shape = 'u32[144,128]{1,0:T(1,128)}', space=vmem, size = 0x12000, scoped, tag = 'internal scratch']
  #allocation2 [shape = 'f32[2,18,72]{2,1,0:T(8,128)}', space=vmem, size = 0x6000, scoped, tag = 'scratch operand']
  %s0 = inlined_call_operand.vmem [shape: f32[32,64], index: 0, kind: input, shape index: {}]
  %s1 = inlined_call_operand.vmem [shape: bf16[3,72,64], index: 1, kind: input, shape index: {}]
  %s2 = inlined_call_operand.vmem [shape: bf16[3,72,64], index: 2, kind: input, shape index: {}]
  %s3 = inlined_call_operand.vmem [shape: f32[6,64], index: 3, kind: input, shape index: {}]
  %s4 = inlined_call_operand.vmem [shape: f32[32,64], index: 4, kind: output, shape index: {}]
  %s5 = sld [smem:[#allocation0]]
  $region26: #{residual_block.1} parent=0
    _
  %s7 = ssub.s32 1, %s5
  %s8 = scalar_select 0, %s7, %s5
  // Predicated region
  $region2: #{residual_block.1} parent=0 // pred_check
    _
  $region3: #{residual_block.1} parent=0 // pred_check_branch
    %10 = sbr.rel (0) target = $region5
  $region4: #{residual_block.1} parent=0 // pred_region
    _
  $region5: #{residual_block.1} parent=0 // pred_fallthru
    _
  // Predicated region
  $region6: #{residual_block.1} parent=0 // pred_check
    _
  $region7: #{residual_block.1} parent=0 // pred_check_branch
    %12 = sbr.rel (0) target = $region9
  $region8: #{residual_block.1} parent=0 // pred_region
    _
  $region9: #{residual_block.1} parent=0 // pred_fallthru
    _
  // Predicated region
  $region10: #{residual_block.1} parent=0 // pred_check
    _
  $region11: #{residual_block.1} parent=0 // pred_check_branch
    %14 = sbr.rel (0) target = $region13
  $region12: #{residual_block.1} parent=0 // pred_region
    _
  $region13: #{residual_block.1} parent=0 // pred_fallthru
    _
  // Predicated region
  $region14: #{residual_block.1} parent=0 // pred_check
    _
  $region15: #{residual_block.1} parent=0 // pred_check_branch
    %16 = sbr.rel (0) target = $region17
  $region16: #{residual_block.1} parent=0 // pred_region
    _
  $region17: #{residual_block.1} parent=0 // pred_fallthru
    _
  %vm18 = vcmask 588800
  %19 = vst.msk [vmem:[#allocation2] sm:$0xff] %vm18, 0.0
  %20 = vst.msk [vmem:[#allocation2 + $0x8] sm:$0xff] %vm18, 0.0
  %vm21 = vcmask 582656
  %22 = vst.msk [vmem:[#allocation2 + $0x10] sm:$0x3] %vm21, 0.0
  %23 = vst.msk [vmem:[#allocation2 + $0x18] sm:$0xff] %vm18, 0.0
  %24 = vst.msk [vmem:[#allocation2 + $0x20] sm:$0xff] %vm18, 0.0
  %25 = vst.msk [vmem:[#allocation2 + $0x28] sm:$0x3] %vm21, 0.0
  %v26 = vld [vmem:[%s0] sm:$0xff]
  %v27 = vld [vmem:[%s0 + $0x8] sm:$0xff]
  %v28 = vld [vmem:[%s0 + $0x10] sm:$0xff]
  %v29 = vld [vmem:[%s0 + $0x18] sm:$0xff]
  %v30 = vld [vmem:[%s3] sm:$0x1]
  %v31 = vld [vmem:[%s3 + $0x1] sm:$0x1]
  %v32 = vld [vmem:[%s3 + $0x2] sm:$0x1]
  %v33 = vld [vmem:[%s3 + $0x3] sm:$0x1]
  %v34 = vld [vmem:[%s3 + $0x4] sm:$0x1]
  %v35 = vld [vmem:[%s3 + $0x5] sm:$0x1]
  %38 = vrot.lane.b32.xlu0 %v26, 4
  %v39 = vpop.permute.xlu0 %38
  %40 = vrot.lane.b32.xlu0 %v27, 4
  %v41 = vpop.permute.xlu0 %40
  %vm44 = vcmask 556064
  %45 = vst.msk [vmem:[#allocation2 + $0x1] sm:$0xff] %vm44, %v39
  %46 = vst.msk [vmem:[#allocation2 + $0x9] sm:$0xff] %vm44, %v41
  %49 = vrot.lane.b32.xlu0 %v28, 4
  %v50 = vpop.permute.xlu0 %49
  %51 = vrot.lane.b32.xlu0 %v29, 4
  %v52 = vpop.permute.xlu0 %51
  %s55 = scalar_lea.vmem [#allocation2], 24
  %56 = vst.msk [vmem:[%s55 + $0x1] sm:$0xff] %vm44, %v50
  %57 = vst.msk [vmem:[%s55 + $0x9] sm:$0xff] %vm44, %v52
  %v58 = vld [vmem:[#allocation2] sm:$0xff]
  %v59 = vld [vmem:[#allocation2 + $0x8] sm:$0xff]
  %v60 = vld [vmem:[%s55] sm:$0xff]
  %v61 = vld [vmem:[%s55 + $0x8] sm:$0xff]
  %v62 = vpack.c.bf16 %v59, %v58
  %v63 = vpack.c.bf16 %v61, %v60
  %v64 = vld [vmem:[%s1] sm:$0xf]
  %v65 = vld [vmem:[%s1 + $0x4] sm:$0xf]
  %v66 = vld [vmem:[%s1 + $0x8] sm:$0xf]
  %v67 = vld [vmem:[%s1 + $0xc] sm:$0xf]
  %v68 = vld [vmem:[%s1 + $0x10] sm:$0xf]
  %v69 = vld [vmem:[%s1 + $0x14] sm:$0xf]
  %v70 = vld [vmem:[%s1 + $0x18] sm:$0xf]
  %v71 = vld [vmem:[%s1 + $0x1c] sm:$0xf]
  %v72 = vld [vmem:[%s1 + $0x20] sm:$0xf]
  %v73 = vld [vmem:[#allocation2 + $0x1] sm:$0xff]
  %v74 = vld [vmem:[#allocation2 + $0x9] sm:$0xff]
  %v75 = vld [vmem:[%s55 + $0x1] sm:$0xff]
  %v76 = vld [vmem:[%s55 + $0x9] sm:$0xff]
  %v77 = vpack.c.bf16 %v74, %v73
  %v78 = vpack.c.bf16 %v76, %v75
  %s79 = scalar_lea.vmem %s1, 36
  %v80 = vld [vmem:[%s79] sm:$0xf]
  %v81 = vld [vmem:[%s79 + $0x4] sm:$0xf]
  %v82 = vld [vmem:[%s79 + $0x8] sm:$0xf]
  %v83 = vld [vmem:[%s79 + $0xc] sm:$0xf]
  %v84 = vld [vmem:[%s79 + $0x10] sm:$0xf]
  %v85 = vld [vmem:[%s79 + $0x14] sm:$0xf]
  %v86 = vld [vmem:[%s79 + $0x18] sm:$0xf]
  %v87 = vld [vmem:[%s79 + $0x1c] sm:$0xf]
  %v88 = vld [vmem:[%s79 + $0x20] sm:$0xf]
  %v98 = vunpack.c.l.b16 %v80
  %v99 = vunpack.c.l.b16 %v81
  %v100 = vunpack.c.l.b16 %v82
  %v101 = vunpack.c.l.b16 %v83
  %v102 = vunpack.c.l.b16 %v84
  %v103 = vunpack.c.l.b16 %v85
  %v104 = vunpack.c.l.b16 %v86
  %v105 = vunpack.c.l.b16 %v87
  %v106 = vunpack.c.l.b16 %v88
  %v107 = vpack.c.b16 %v99, %v98
  %v108 = vpack.c.b16 %v101, %v100
  %v109 = vpack.c.b16 %v103, %v102
  %v110 = vpack.c.b16 %v105, %v104
  %v111 = vpack.c.b16 %v106, %v106
  %v117 = vsel %vm18, %v77, 0
  %v120 = vsel %vm18, %v78, 0
  %vm122 = vcmask 1043456
  %v124 = vsel %vm122, %v111, 0
  %126 = vmatprep.subr.bf16.mxu0 0
  %127 = vmatpush1.bf16.msra.mxu0 0
  %128 = vmatprep.subr.bf16.mxu0 0
  %129 = vmatpush1.bf16.msra.mxu0 0
  %130 = vmatprep.subr.bf16.mxu0 0
  %131 = vmatpush1.bf16.msra.mxu0 0
  %132 = vmatprep.subr.bf16.mxu0 0
  %133 = vmatpush1.bf16.msra.mxu0 %v124
  %134 = vmatprep.subr.bf16.mxu0 0
  %135 = vmatpush1.bf16.msra.mxu0 %v110
  %136 = vmatprep.subr.bf16.mxu0 0
  %137 = vmatpush1.bf16.msra.mxu0 %v109
  %138 = vmatprep.subr.bf16.mxu0 0
  %139 = vmatpush1.bf16.msra.mxu0 %v108
  %140 = vmatprep.subr.bf16.mxu0 0
  %141 = vmatpush1.bf16.msra.mxu0 %v107
  %142 = vmatprep.subr.bf16.mxu0 0
  %143 = vmatpush2.bf16.msra.mxu0 0
  %144 = vmatprep.subr.bf16.mxu0 0
  %145 = vmatpush2.bf16.msra.mxu0 0
  %146 = vmatprep.subr.bf16.mxu0 0
  %147 = vmatpush2.bf16.msra.mxu0 0
  %148 = vmatprep.subr.bf16.mxu0 0
  %149 = vmatpush2.bf16.msra.mxu0 0
  %150 = vmatprep.subr.bf16.mxu0 0
  %151 = vmatpush2.bf16.msra.mxu0 0
  %152 = vmatprep.subr.bf16.mxu0 0
  %153 = vmatpush2.bf16.msra.mxu0 0
  %154 = vmatprep.subr.bf16.mxu0 0
  %155 = vmatpush2.bf16.msra.mxu0 0
  %156 = vmatprep.subr.bf16.mxu0 0
  %157 = vmatpush2.bf16.msra.mxu0 0
  %158 = vmatprep.mubr.bf16.mxu0 0
  %159 = vmatmul.mubr.bf16.gmra.mxu0 %v117
  %v160 = vpop.f32.mrf.mxu0
  %v161 = vadd.f32 0.0, %v160
  %v162 = vpop.f32.mrf.mxu0
  %v163 = vpop.f32.mrf.mxu0
  %v164 = vadd.f32 0.0, %v163
  %v165 = vpop.f32.mrf.mxu0
  %166 = vmatprep.mubr.bf16.mxu0 0
  %167 = vmatmul.mubr.bf16.gmra.mxu0 %v120
  %v168 = vpop.f32.mrf.mxu0
  %v169 = vadd.f32 0.0, %v168
  %v170 = vpop.f32.mrf.mxu0
  %v171 = vpop.f32.mrf.mxu0
  %v172 = vadd.f32 0.0, %v171
  %v173 = vpop.f32.mrf.mxu0
  %174 = vdwg.mxu0
  %v184 = vunpack.c.l.b16 %v64
  %v185 = vunpack.c.l.b16 %v65
  %v186 = vunpack.c.l.b16 %v66
  %v187 = vunpack.c.l.b16 %v67
  %v188 = vunpack.c.l.b16 %v68
  %v189 = vunpack.c.l.b16 %v69
  %v190 = vunpack.c.l.b16 %v70
  %v191 = vunpack.c.l.b16 %v71
  %v192 = vunpack.c.l.b16 %v72
  %v193 = vpack.c.b16 %v185, %v184
  %v194 = vpack.c.b16 %v187, %v186
  %v195 = vpack.c.b16 %v189, %v188
  %v196 = vpack.c.b16 %v191, %v190
  %v197 = vpack.c.b16 %v192, %v192
  %v203 = vsel %vm18, %v62, 0
  %v206 = vsel %vm18, %v63, 0
  %v209 = vsel %vm122, %v197, 0
  %211 = vmatprep.subr.bf16.mxu0 0
  %212 = vmatpush1.bf16.msra.mxu0 0
  %213 = vmatprep.subr.bf16.mxu0 0
  %214 = vmatpush1.bf16.msra.mxu0 0
  %215 = vmatprep.subr.bf16.mxu0 0
  %216 = vmatpush1.bf16.msra.mxu0 0
  %217 = vmatprep.subr.bf16.mxu0 0
  %218 = vmatpush1.bf16.msra.mxu0 %v209
  %219 = vmatprep.subr.bf16.mxu0 0
  %220 = vmatpush1.bf16.msra.mxu0 %v196
  %221 = vmatprep.subr.bf16.mxu0 0
  %222 = vmatpush1.bf16.msra.mxu0 %v195
  %223 = vmatprep.subr.bf16.mxu0 0
  %224 = vmatpush1.bf16.msra.mxu0 %v194
  %225 = vmatprep.subr.bf16.mxu0 0
  %226 = vmatpush1.bf16.msra.mxu0 %v193
  %227 = vmatprep.subr.bf16.mxu0 0
  %228 = vmatpush2.bf16.msra.mxu0 0
  %229 = vmatprep.subr.bf16.mxu0 0
  %230 = vmatpush2.bf16.msra.mxu0 0
  %231 = vmatprep.subr.bf16.mxu0 0
  %232 = vmatpush2.bf16.msra.mxu0 0
  %233 = vmatprep.subr.bf16.mxu0 0
  %234 = vmatpush2.bf16.msra.mxu0 0
  %235 = vmatprep.subr.bf16.mxu0 0
  %236 = vmatpush2.bf16.msra.mxu0 0
  %237 = vmatprep.subr.bf16.mxu0 0
  %238 = vmatpush2.bf16.msra.mxu0 0
  %239 = vmatprep.subr.bf16.mxu0 0
  %240 = vmatpush2.bf16.msra.mxu0 0
  %241 = vmatprep.subr.bf16.mxu0 0
  %242 = vmatpush2.bf16.msra.mxu0 0
  %243 = vmatprep.mubr.bf16.mxu0 0
  %244 = vmatmul.mubr.bf16.gmra.mxu0 %v203
  %v245 = vpop.f32.mrf.mxu0
  %v246 = vadd.f32 %v161, %v245
  %v247 = vpop.f32.mrf.mxu0
  %v248 = vpop.f32.mrf.mxu0
  %v249 = vadd.f32 %v164, %v248
  %v250 = vpop.f32.mrf.mxu0
  %251 = vmatprep.mubr.bf16.mxu0 0
  %252 = vmatmul.mubr.bf16.gmra.mxu0 %v206
  %v253 = vpop.f32.mrf.mxu0
  %v254 = vadd.f32 %v169, %v253
  %v255 = vpop.f32.mrf.mxu0
  %v256 = vpop.f32.mrf.mxu0
  %v257 = vadd.f32 %v172, %v256
  %v258 = vpop.f32.mrf.mxu0
  %259 = vdwg.mxu0
  %v260 = vld [vmem:[#allocation2 + $0x2] sm:$0xff]
  %v261 = vld [vmem:[#allocation2 + $0xa] sm:$0xff]
  %v262 = vld [vmem:[%s55 + $0x2] sm:$0xff]
  %v263 = vld [vmem:[%s55 + $0xa] sm:$0xff]
  %v264 = vpack.c.bf16 %v261, %v260
  %v265 = vpack.c.bf16 %v263, %v262
  %s266 = scalar_lea.vmem %s1, 72
  %v267 = vld [vmem:[%s266] sm:$0xf]
  %v268 = vld [vmem:[%s266 + $0x4] sm:$0xf]
  %v269 = vld [vmem:[%s266 + $0x8] sm:$0xf]
  %v270 = vld [vmem:[%s266 + $0xc] sm:$0xf]
  %v271 = vld [vmem:[%s266 + $0x10] sm:$0xf]
  %v272 = vld [vmem:[%s266 + $0x14] sm:$0xf]
  %v273 = vld [vmem:[%s266 + $0x18] sm:$0xf]
  %v274 = vld [vmem:[%s266 + $0x1c] sm:$0xf]
  %v275 = vld [vmem:[%s266 + $0x20] sm:$0xf]
  %v285 = vunpack.c.l.b16 %v267
  %v286 = vunpack.c.l.b16 %v268
  %v287 = vunpack.c.l.b16 %v269
  %v288 = vunpack.c.l.b16 %v270
  %v289 = vunpack.c.l.b16 %v271
  %v290 = vunpack.c.l.b16 %v272
  %v291 = vunpack.c.l.b16 %v273
  %v292 = vunpack.c.l.b16 %v274
  %v293 = vunpack.c.l.b16 %v275
  %v294 = vpack.c.b16 %v286, %v285
  %v295 = vpack.c.b16 %v288, %v287
  %v296 = vpack.c.b16 %v290, %v289
  %v297 = vpack.c.b16 %v292, %v291
  %v298 = vpack.c.b16 %v293, %v293
  %v304 = vsel %vm18, %v264, 0
  %v307 = vsel %vm18, %v265, 0
  %v310 = vsel %vm122, %v298, 0
  %312 = vmatprep.subr.bf16.mxu0 0
  %313 = vmatpush1.bf16.msra.mxu0 0
  %314 = vmatprep.subr.bf16.mxu0 0
  %315 = vmatpush1.bf16.msra.mxu0 0
  %316 = vmatprep.subr.bf16.mxu0 0
  %317 = vmatpush1.bf16.msra.mxu0 0
  %318 = vmatprep.subr.bf16.mxu0 0
  %319 = vmatpush1.bf16.msra.mxu0 %v310
  %320 = vmatprep.subr.bf16.mxu0 0
  %321 = vmatpush1.bf16.msra.mxu0 %v297
  %322 = vmatprep.subr.bf16.mxu0 0
  %323 = vmatpush1.bf16.msra.mxu0 %v296
  %324 = vmatprep.subr.bf16.mxu0 0
  %325 = vmatpush1.bf16.msra.mxu0 %v295
  %326 = vmatprep.subr.bf16.mxu0 0
  %327 = vmatpush1.bf16.msra.mxu0 %v294
  %328 = vmatprep.subr.bf16.mxu0 0
  %329 = vmatpush2.bf16.msra.mxu0 0
  %330 = vmatprep.subr.bf16.mxu0 0
  %331 = vmatpush2.bf16.msra.mxu0 0
  %332 = vmatprep.subr.bf16.mxu0 0
  %333 = vmatpush2.bf16.msra.mxu0 0
  %334 = vmatprep.subr.bf16.mxu0 0
  %335 = vmatpush2.bf16.msra.mxu0 0
  %336 = vmatprep.subr.bf16.mxu0 0
  %337 = vmatpush2.bf16.msra.mxu0 0
  %338 = vmatprep.subr.bf16.mxu0 0
  %339 = vmatpush2.bf16.msra.mxu0 0
  %340 = vmatprep.subr.bf16.mxu0 0
  %341 = vmatpush2.bf16.msra.mxu0 0
  %342 = vmatprep.subr.bf16.mxu0 0
  %343 = vmatpush2.bf16.msra.mxu0 0
  %344 = vmatprep.mubr.bf16.mxu0 0
  %345 = vmatmul.mubr.bf16.gmra.mxu0 %v304
  %v346 = vpop.f32.mrf.mxu0
  %v347 = vadd.f32 0.0, %v346
  %v348 = vpop.f32.mrf.mxu0
  %v349 = vpop.f32.mrf.mxu0
  %v350 = vadd.f32 0.0, %v349
  %v351 = vpop.f32.mrf.mxu0
  %352 = vmatprep.mubr.bf16.mxu0 0
  %353 = vmatmul.mubr.bf16.gmra.mxu0 %v307
  %v354 = vpop.f32.mrf.mxu0
  %v355 = vadd.f32 0.0, %v354
  %v356 = vpop.f32.mrf.mxu0
  %v357 = vpop.f32.mrf.mxu0
  %v358 = vadd.f32 0.0, %v357
  %v359 = vpop.f32.mrf.mxu0
  %360 = vdwg.mxu0
  %v361 = vadd.f32 %v246, %v347
  %v362 = vadd.f32 %v249, %v350
  %v363 = vadd.f32 %v254, %v355
  %v364 = vadd.f32 %v257, %v358
  %v365 = vlaneseq
  %v366 = vshrl.u32 %v365, 7
  %v367 = vsub.s32 0, %v366
  %v368 = vrot.slane %v30, %v367
  %v369 = vadd.f32 %v361, %v368
  %v370 = vadd.f32 %v362, %v368
  %v371 = vadd.f32 %v363, %v368
  %v372 = vadd.f32 %v364, %v368
  %vm373 = vcmask 523264
  %v374 = vsel %vm373, %v369, 0.0
  %v375 = vsel %vm373, %v370, 0.0
  %v376 = vadd.f32 %v374, %v375
  %v377 = vsel %vm373, %v371, 0.0
  %v378 = vadd.f32 %v376, %v377
  %v379 = vsel %vm373, %v372, 0.0
  %v380 = vadd.f32 %v378, %v379
  %v381 = vrot.slane %v380, 4
  %v382 = vadd.f32 %v380, %v381
  %v383 = vrot.slane %v382, 2
  %v384 = vadd.f32 %v382, %v383
  %v385 = vrot.slane %v384, 1
  %v386 = vadd.f32 %v384, %v385
  %388 = vrot.lane.b32.xlu0 %v386, 124
  %v389 = vpop.permute.xlu0 %388
  %v391 = vadd.f32 %v386, %v389
  %392 = vrot.lane.b32.xlu0 %v386, 120
  %v393 = vpop.permute.xlu0 %392
  %v395 = vadd.f32 %v391, %v393
  %396 = vrot.lane.b32.xlu0 %v386, 116
  %v397 = vpop.permute.xlu0 %396
  %v399 = vadd.f32 %v395, %v397
  %400 = vrot.lane.b32.xlu0 %v386, 112
  %v401 = vpop.permute.xlu0 %400
  %v403 = vadd.f32 %v399, %v401
  %404 = vrot.lane.b32.xlu0 %v386, 108
  %v405 = vpop.permute.xlu0 %404
  %v407 = vadd.f32 %v403, %v405
  %408 = vrot.lane.b32.xlu0 %v386, 104
  %v409 = vpop.permute.xlu0 %408
  %v411 = vadd.f32 %v407, %v409
  %412 = vrot.lane.b32.xlu0 %v386, 100
  %v413 = vpop.permute.xlu0 %412
  %v415 = vadd.f32 %v411, %v413
  %416 = vrot.lane.b32.xlu0 %v386, 96
  %v417 = vpop.permute.xlu0 %416
  %v419 = vadd.f32 %v415, %v417
  %420 = vrot.lane.b32.xlu0 %v386, 92
  %v421 = vpop.permute.xlu0 %420
  %v423 = vadd.f32 %v419, %v421
  %424 = vrot.lane.b32.xlu0 %v386, 88
  %v425 = vpop.permute.xlu0 %424
  %v427 = vadd.f32 %v423, %v425
  %428 = vrot.lane.b32.xlu0 %v386, 84
  %v429 = vpop.permute.xlu0 %428
  %v431 = vadd.f32 %v427, %v429
  %432 = vrot.lane.b32.xlu0 %v386, 80
  %v433 = vpop.permute.xlu0 %432
  %v435 = vadd.f32 %v431, %v433
  %436 = vrot.lane.b32.xlu0 %v386, 76
  %v437 = vpop.permute.xlu0 %436
  %v439 = vadd.f32 %v435, %v437
  %440 = vrot.lane.b32.xlu0 %v386, 72
  %v441 = vpop.permute.xlu0 %440
  %v443 = vadd.f32 %v439, %v441
  %444 = vrot.lane.b32.xlu0 %v386, 68
  %v445 = vpop.permute.xlu0 %444
  %v447 = vadd.f32 %v443, %v445
  %v448 = vmul.f32 %v447, 0.001953125
  %450 = vrot.lane.b32.xlu0 %v448, 4
  %v451 = vpop.permute.xlu0 %450
  %453 = vrot.lane.b32.xlu0 %v448, 8
  %v454 = vpop.permute.xlu0 %453
  %456 = vrot.lane.b32.xlu0 %v448, 12
  %v457 = vpop.permute.xlu0 %456
  %459 = vrot.lane.b32.xlu0 %v448, 16
  %v460 = vpop.permute.xlu0 %459
  %462 = vrot.lane.b32.xlu0 %v448, 20
  %v463 = vpop.permute.xlu0 %462
  %465 = vrot.lane.b32.xlu0 %v448, 24
  %v466 = vpop.permute.xlu0 %465
  %468 = vrot.lane.b32.xlu0 %v448, 28
  %v469 = vpop.permute.xlu0 %468
  %471 = vrot.lane.b32.xlu0 %v448, 32
  %v472 = vpop.permute.xlu0 %471
  %474 = vrot.lane.b32.xlu0 %v448, 36
  %v475 = vpop.permute.xlu0 %474
  %477 = vrot.lane.b32.xlu0 %v448, 40
  %v478 = vpop.permute.xlu0 %477
  %480 = vrot.lane.b32.xlu0 %v448, 44
  %v481 = vpop.permute.xlu0 %480
  %483 = vrot.lane.b32.xlu0 %v448, 48
  %v484 = vpop.permute.xlu0 %483
  %486 = vrot.lane.b32.xlu0 %v448, 52
  %v487 = vpop.permute.xlu0 %486
  %489 = vrot.lane.b32.xlu0 %v448, 56
  %v490 = vpop.permute.xlu0 %489
  %492 = vrot.lane.b32.xlu0 %v448, 60
  %v493 = vpop.permute.xlu0 %492
  %vm495 = vcmask 31744
  %v496 = vsel %vm495, %v448, %v451
  %vm497 = vcmask 64512
  %v498 = vsel %vm497, %v496, %v454
  %vm499 = vcmask 97280
  %v500 = vsel %vm499, %v498, %v457
  %vm501 = vcmask 130048
  %v502 = vsel %vm501, %v500, %v460
  %vm503 = vcmask 162816
  %v504 = vsel %vm503, %v502, %v463
  %vm505 = vcmask 195584
  %v506 = vsel %vm505, %v504, %v466
  %vm507 = vcmask 228352
  %v508 = vsel %vm507, %v506, %v469
  %vm509 = vcmask 261120
  %v510 = vsel %vm509, %v508, %v472
  %vm511 = vcmask 293888
  %v512 = vsel %vm511, %v510, %v475
  %vm513 = vcmask 326656
  %v514 = vsel %vm513, %v512, %v478
  %vm515 = vcmask 359424
  %v516 = vsel %vm515, %v514, %v481
  %vm517 = vcmask 392192
  %v518 = vsel %vm517, %v516, %v484
  %vm519 = vcmask 424960
  %v520 = vsel %vm519, %v518, %v487
  %vm521 = vcmask 457728
  %v522 = vsel %vm521, %v520, %v490
  %vm523 = vcmask 490496
  %v524 = vsel %vm523, %v522, %v493
  %v525 = vlaneseq
  %v526 = vshrl.u32 %v525, 7
  %v527 = vsub.s32 0, %v526
  %v528 = vrot.slane %v524, %v527
  %v529 = vsub.f32 %v369, %v528
  %v530 = vsub.f32 %v370, %v528
  %v531 = vsub.f32 %v371, %v528
  %v532 = vsub.f32 %v372, %v528
  %v533 = vmul.f32 %v529, %v529
  %v534 = vmul.f32 %v530, %v530
  %v535 = vmul.f32 %v531, %v531
  %v536 = vmul.f32 %v532, %v532
  %v537 = vsel %vm373, %v533, 0.0
  %v538 = vsel %vm373, %v534, 0.0
  %v539 = vadd.f32 %v537, %v538
  %v540 = vsel %vm373, %v535, 0.0
  %v541 = vadd.f32 %v539, %v540
  %v542 = vsel %vm373, %v536, 0.0
  %v543 = vadd.f32 %v541, %v542
  %v544 = vrot.slane %v543, 4
  %v545 = vadd.f32 %v543, %v544
  %v546 = vrot.slane %v545, 2
  %v547 = vadd.f32 %v545, %v546
  %v548 = vrot.slane %v547, 1
  %v549 = vadd.f32 %v547, %v548
  %551 = vrot.lane.b32.xlu0 %v549, 124
  %v552 = vpop.permute.xlu0 %551
  %v554 = vadd.f32 %v549, %v552
  %555 = vrot.lane.b32.xlu0 %v549, 120
  %v556 = vpop.permute.xlu0 %555
  %v558 = vadd.f32 %v554, %v556
  %559 = vrot.lane.b32.xlu0 %v549, 116
  %v560 = vpop.permute.xlu0 %559
  %v562 = vadd.f32 %v558, %v560
  %563 = vrot.lane.b32.xlu0 %v549, 112
  %v564 = vpop.permute.xlu0 %563
  %v566 = vadd.f32 %v562, %v564
  %567 = vrot.lane.b32.xlu0 %v549, 108
  %v568 = vpop.permute.xlu0 %567
  %v570 = vadd.f32 %v566, %v568
  %571 = vrot.lane.b32.xlu0 %v549, 104
  %v572 = vpop.permute.xlu0 %571
  %v574 = vadd.f32 %v570, %v572
  %575 = vrot.lane.b32.xlu0 %v549, 100
  %v576 = vpop.permute.xlu0 %575
  %v578 = vadd.f32 %v574, %v576
  %579 = vrot.lane.b32.xlu0 %v549, 96
  %v580 = vpop.permute.xlu0 %579
  %v582 = vadd.f32 %v578, %v580
  %583 = vrot.lane.b32.xlu0 %v549, 92
  %v584 = vpop.permute.xlu0 %583
  %v586 = vadd.f32 %v582, %v584
  %587 = vrot.lane.b32.xlu0 %v549, 88
  %v588 = vpop.permute.xlu0 %587
  %v590 = vadd.f32 %v586, %v588
  %591 = vrot.lane.b32.xlu0 %v549, 84
  %v592 = vpop.permute.xlu0 %591
  %v594 = vadd.f32 %v590, %v592
  %595 = vrot.lane.b32.xlu0 %v549, 80
  %v596 = vpop.permute.xlu0 %595
  %v598 = vadd.f32 %v594, %v596
  %599 = vrot.lane.b32.xlu0 %v549, 76
  %v600 = vpop.permute.xlu0 %599
  %v602 = vadd.f32 %v598, %v600
  %603 = vrot.lane.b32.xlu0 %v549, 72
  %v604 = vpop.permute.xlu0 %603
  %v606 = vadd.f32 %v602, %v604
  %607 = vrot.lane.b32.xlu0 %v549, 68
  %v608 = vpop.permute.xlu0 %607
  %v610 = vadd.f32 %v606, %v608
  %v611 = vmul.f32 %v610, 0.001953125
  %613 = vrot.lane.b32.xlu0 %v611, 4
  %v614 = vpop.permute.xlu0 %613
  %616 = vrot.lane.b32.xlu0 %v611, 8
  %v617 = vpop.permute.xlu0 %616
  %619 = vrot.lane.b32.xlu0 %v611, 12
  %v620 = vpop.permute.xlu0 %619
  %622 = vrot.lane.b32.xlu0 %v611, 16
  %v623 = vpop.permute.xlu0 %622
  %625 = vrot.lane.b32.xlu0 %v611, 20
  %v626 = vpop.permute.xlu0 %625
  %628 = vrot.lane.b32.xlu0 %v611, 24
  %v629 = vpop.permute.xlu0 %628
  %631 = vrot.lane.b32.xlu0 %v611, 28
  %v632 = vpop.permute.xlu0 %631
  %634 = vrot.lane.b32.xlu0 %v611, 32
  %v635 = vpop.permute.xlu0 %634
  %637 = vrot.lane.b32.xlu0 %v611, 36
  %v638 = vpop.permute.xlu0 %637
  %640 = vrot.lane.b32.xlu0 %v611, 40
  %v641 = vpop.permute.xlu0 %640
  %643 = vrot.lane.b32.xlu0 %v611, 44
  %v644 = vpop.permute.xlu0 %643
  %646 = vrot.lane.b32.xlu0 %v611, 48
  %v647 = vpop.permute.xlu0 %646
  %649 = vrot.lane.b32.xlu0 %v611, 52
  %v650 = vpop.permute.xlu0 %649
  %652 = vrot.lane.b32.xlu0 %v611, 56
  %v653 = vpop.permute.xlu0 %652
  %655 = vrot.lane.b32.xlu0 %v611, 60
  %v656 = vpop.permute.xlu0 %655
  %v658 = vsel %vm495, %v611, %v614
  %v659 = vsel %vm497, %v658, %v617
  %v660 = vsel %vm499, %v659, %v620
  %v661 = vsel %vm501, %v660, %v623
  %v662 = vsel %vm503, %v661, %v626
  %v663 = vsel %vm505, %v662, %v629
  %v664 = vsel %vm507, %v663, %v632
  %v665 = vsel %vm509, %v664, %v635
  %v666 = vsel %vm511, %v665, %v638
  %v667 = vsel %vm513, %v666, %v641
  %v668 = vsel %vm515, %v667, %v644
  %v669 = vsel %vm517, %v668, %v647
  %v670 = vsel %vm519, %v669, %v650
  %v671 = vsel %vm521, %v670, %v653
  %v672 = vsel %vm523, %v671, %v656
  %v673 = vadd.f32 %v672, 1e-05
  %v674 = vrsqrt.pop %v673
  %v675 = vmul.f32 %v31, %v674
  %v676 = vlaneseq
  %v677 = vshrl.u32 %v676, 7
  %v678 = vsub.s32 0, %v677
  %v679 = vrot.slane %v675, %v678
  %v680 = vmul.f32 %v529, %v679
  %v681 = vmul.f32 %v530, %v679
  %v682 = vmul.f32 %v531, %v679
  %v683 = vmul.f32 %v532, %v679
  %v684 = vlaneseq
  %v685 = vshrl.u32 %v684, 7
  %v686 = vsub.s32 0, %v685
  %v687 = vrot.slane %v32, %v686
  %v688 = vadd.f32 %v680, %v687
  %v689 = vadd.f32 %v681, %v687
  %v690 = vadd.f32 %v682, %v687
  %v691 = vadd.f32 %v683, %v687
  %v692 = vmax.f32 %v688, 0.0
  %v693 = vmax.f32 %v689, 0.0
  %v694 = vmax.f32 %v690, 0.0
  %v695 = vmax.f32 %v691, 0.0
  %698 = vrot.lane.b32.xlu0 %v692, 4
  %v699 = vpop.permute.xlu0 %698
  %700 = vrot.lane.b32.xlu0 %v693, 4
  %v701 = vpop.permute.xlu0 %700
  %704 = vst.msk [vmem:[#allocation2 + $0x1] sm:$0xff] %vm44, %v699
  %705 = vst.msk [vmem:[#allocation2 + $0x9] sm:$0xff] %vm44, %v701
  %708 = vrot.lane.b32.xlu0 %v694, 4
  %v709 = vpop.permute.xlu0 %708
  %710 = vrot.lane.b32.xlu0 %v695, 4
  %v711 = vpop.permute.xlu0 %710
  %714 = vst.msk [vmem:[%s55 + $0x1] sm:$0xff] %vm44, %v709
  %715 = vst.msk [vmem:[%s55 + $0x9] sm:$0xff] %vm44, %v711
  %v716 = vld [vmem:[#allocation2] sm:$0xff]
  %v717 = vld [vmem:[#allocation2 + $0x8] sm:$0xff]
  %v718 = vld [vmem:[%s55] sm:$0xff]
  %v719 = vld [vmem:[%s55 + $0x8] sm:$0xff]
  %v720 = vpack.c.bf16 %v717, %v716
  %v721 = vpack.c.bf16 %v719, %v718
  %v722 = vld [vmem:[%s2] sm:$0xf]
  %v723 = vld [vmem:[%s2 + $0x4] sm:$0xf]
  %v724 = vld [vmem:[%s2 + $0x8] sm:$0xf]
  %v725 = vld [vmem:[%s2 + $0xc] sm:$0xf]
  %v726 = vld [vmem:[%s2 + $0x10] sm:$0xf]
  %v727 = vld [vmem:[%s2 + $0x14] sm:$0xf]
  %v728 = vld [vmem:[%s2 + $0x18] sm:$0xf]
  %v729 = vld [vmem:[%s2 + $0x1c] sm:$0xf]
  %v730 = vld [vmem:[%s2 + $0x20] sm:$0xf]
  %v731 = vld [vmem:[#allocation2 + $0x1] sm:$0xff]
  %v732 = vld [vmem:[#allocation2 + $0x9] sm:$0xff]
  %v733 = vld [vmem:[%s55 + $0x1] sm:$0xff]
  %v734 = vld [vmem:[%s55 + $0x9] sm:$0xff]
  %v735 = vpack.c.bf16 %v732, %v731
  %v736 = vpack.c.bf16 %v734, %v733
  %s737 = scalar_lea.vmem %s2, 36
  %v738 = vld [vmem:[%s737] sm:$0xf]
  %v739 = vld [vmem:[%s737 + $0x4] sm:$0xf]
  %v740 = vld [vmem:[%s737 + $0x8] sm:$0xf]
  %v741 = vld [vmem:[%s737 + $0xc] sm:$0xf]
  %v742 = vld [vmem:[%s737 + $0x10] sm:$0xf]
  %v743 = vld [vmem:[%s737 + $0x14] sm:$0xf]
  %v744 = vld [vmem:[%s737 + $0x18] sm:$0xf]
  %v745 = vld [vmem:[%s737 + $0x1c] sm:$0xf]
  %v746 = vld [vmem:[%s737 + $0x20] sm:$0xf]
  %v756 = vunpack.c.l.b16 %v738
  %v757 = vunpack.c.l.b16 %v739
  %v758 = vunpack.c.l.b16 %v740
  %v759 = vunpack.c.l.b16 %v741
  %v760 = vunpack.c.l.b16 %v742
  %v761 = vunpack.c.l.b16 %v743
  %v762 = vunpack.c.l.b16 %v744
  %v763 = vunpack.c.l.b16 %v745
  %v764 = vunpack.c.l.b16 %v746
  %v765 = vpack.c.b16 %v757, %v756
  %v766 = vpack.c.b16 %v759, %v758
  %v767 = vpack.c.b16 %v761, %v760
  %v768 = vpack.c.b16 %v763, %v762
  %v769 = vpack.c.b16 %v764, %v764
  %v775 = vsel %vm18, %v735, 0
  %v778 = vsel %vm18, %v736, 0
  %v781 = vsel %vm122, %v769, 0
  %783 = vmatprep.subr.bf16.mxu0 0
  %784 = vmatpush1.bf16.msra.mxu0 0
  %785 = vmatprep.subr.bf16.mxu0 0
  %786 = vmatpush1.bf16.msra.mxu0 0
  %787 = vmatprep.subr.bf16.mxu0 0
  %788 = vmatpush1.bf16.msra.mxu0 0
  %789 = vmatprep.subr.bf16.mxu0 0
  %790 = vmatpush1.bf16.msra.mxu0 %v781
  %791 = vmatprep.subr.bf16.mxu0 0
  %792 = vmatpush1.bf16.msra.mxu0 %v768
  %793 = vmatprep.subr.bf16.mxu0 0
  %794 = vmatpush1.bf16.msra.mxu0 %v767
  %795 = vmatprep.subr.bf16.mxu0 0
  %796 = vmatpush1.bf16.msra.mxu0 %v766
  %797 = vmatprep.subr.bf16.mxu0 0
  %798 = vmatpush1.bf16.msra.mxu0 %v765
  %799 = vmatprep.subr.bf16.mxu0 0
  %800 = vmatpush2.bf16.msra.mxu0 0
  %801 = vmatprep.subr.bf16.mxu0 0
  %802 = vmatpush2.bf16.msra.mxu0 0
  %803 = vmatprep.subr.bf16.mxu0 0
  %804 = vmatpush2.bf16.msra.mxu0 0
  %805 = vmatprep.subr.bf16.mxu0 0
  %806 = vmatpush2.bf16.msra.mxu0 0
  %807 = vmatprep.subr.bf16.mxu0 0
  %808 = vmatpush2.bf16.msra.mxu0 0
  %809 = vmatprep.subr.bf16.mxu0 0
  %810 = vmatpush2.bf16.msra.mxu0 0
  %811 = vmatprep.subr.bf16.mxu0 0
  %812 = vmatpush2.bf16.msra.mxu0 0
  %813 = vmatprep.subr.bf16.mxu0 0
  %814 = vmatpush2.bf16.msra.mxu0 0
  %815 = vmatprep.mubr.bf16.mxu0 0
  %816 = vmatmul.mubr.bf16.gmra.mxu0 %v775
  %v817 = vpop.f32.mrf.mxu0
  %v818 = vadd.f32 0.0, %v817
  %v819 = vpop.f32.mrf.mxu0
  %v820 = vpop.f32.mrf.mxu0
  %v821 = vadd.f32 0.0, %v820
  %v822 = vpop.f32.mrf.mxu0
  %823 = vmatprep.mubr.bf16.mxu0 0
  %824 = vmatmul.mubr.bf16.gmra.mxu0 %v778
  %v825 = vpop.f32.mrf.mxu0
  %v826 = vadd.f32 0.0, %v825
  %v827 = vpop.f32.mrf.mxu0
  %v828 = vpop.f32.mrf.mxu0
  %v829 = vadd.f32 0.0, %v828
  %v830 = vpop.f32.mrf.mxu0
  %831 = vdwg.mxu0
  %v841 = vunpack.c.l.b16 %v722
  %v842 = vunpack.c.l.b16 %v723
  %v843 = vunpack.c.l.b16 %v724
  %v844 = vunpack.c.l.b16 %v725
  %v845 = vunpack.c.l.b16 %v726
  %v846 = vunpack.c.l.b16 %v727
  %v847 = vunpack.c.l.b16 %v728
  %v848 = vunpack.c.l.b16 %v729
  %v849 = vunpack.c.l.b16 %v730
  %v850 = vpack.c.b16 %v842, %v841
  %v851 = vpack.c.b16 %v844, %v843
  %v852 = vpack.c.b16 %v846, %v845
  %v853 = vpack.c.b16 %v848, %v847
  %v854 = vpack.c.b16 %v849, %v849
  %v860 = vsel %vm18, %v720, 0
  %v863 = vsel %vm18, %v721, 0
  %v866 = vsel %vm122, %v854, 0
  %868 = vmatprep.subr.bf16.mxu0 0
  %869 = vmatpush1.bf16.msra.mxu0 0
  %870 = vmatprep.subr.bf16.mxu0 0
  %871 = vmatpush1.bf16.msra.mxu0 0
  %872 = vmatprep.subr.bf16.mxu0 0
  %873 = vmatpush1.bf16.msra.mxu0 0
  %874 = vmatprep.subr.bf16.mxu0 0
  %875 = vmatpush1.bf16.msra.mxu0 %v866
  %876 = vmatprep.subr.bf16.mxu0 0
  %877 = vmatpush1.bf16.msra.mxu0 %v853
  %878 = vmatprep.subr.bf16.mxu0 0
  %879 = vmatpush1.bf16.msra.mxu0 %v852
  %880 = vmatprep.subr.bf16.mxu0 0
  %881 = vmatpush1.bf16.msra.mxu0 %v851
  %882 = vmatprep.subr.bf16.mxu0 0
  %883 = vmatpush1.bf16.msra.mxu0 %v850
  %884 = vmatprep.subr.bf16.mxu0 0
  %885 = vmatpush2.bf16.msra.mxu0 0
  %886 = vmatprep.subr.bf16.mxu0 0
  %887 = vmatpush2.bf16.msra.mxu0 0
  %888 = vmatprep.subr.bf16.mxu0 0
  %889 = vmatpush2.bf16.msra.mxu0 0
  %890 = vmatprep.subr.bf16.mxu0 0
  %891 = vmatpush2.bf16.msra.mxu0 0
  %892 = vmatprep.subr.bf16.mxu0 0
  %893 = vmatpush2.bf16.msra.mxu0 0
  %894 = vmatprep.subr.bf16.mxu0 0
  %895 = vmatpush2.bf16.msra.mxu0 0
  %896 = vmatprep.subr.bf16.mxu0 0
  %897 = vmatpush2.bf16.msra.mxu0 0
  %898 = vmatprep.subr.bf16.mxu0 0
  %899 = vmatpush2.bf16.msra.mxu0 0
  %900 = vmatprep.mubr.bf16.mxu0 0
  %901 = vmatmul.mubr.bf16.gmra.mxu0 %v860
  %v902 = vpop.f32.mrf.mxu0
  %v903 = vadd.f32 %v818, %v902
  %v904 = vpop.f32.mrf.mxu0
  %v905 = vpop.f32.mrf.mxu0
  %v906 = vadd.f32 %v821, %v905
  %v907 = vpop.f32.mrf.mxu0
  %908 = vmatprep.mubr.bf16.mxu0 0
  %909 = vmatmul.mubr.bf16.gmra.mxu0 %v863
  %v910 = vpop.f32.mrf.mxu0
  %v911 = vadd.f32 %v826, %v910
  %v912 = vpop.f32.mrf.mxu0
  %v913 = vpop.f32.mrf.mxu0
  %v914 = vadd.f32 %v829, %v913
  %v915 = vpop.f32.mrf.mxu0
  %916 = vdwg.mxu0
  %v917 = vld [vmem:[#allocation2 + $0x2] sm:$0xff]
  %v918 = vld [vmem:[#allocation2 + $0xa] sm:$0xff]
  %v919 = vld [vmem:[%s55 + $0x2] sm:$0xff]
  %v920 = vld [vmem:[%s55 + $0xa] sm:$0xff]
  %v921 = vpack.c.bf16 %v918, %v917
  %v922 = vpack.c.bf16 %v920, %v919
  %s923 = scalar_lea.vmem %s2, 72
  %v924 = vld [vmem:[%s923] sm:$0xf]
  %v925 = vld [vmem:[%s923 + $0x4] sm:$0xf]
  %v926 = vld [vmem:[%s923 + $0x8] sm:$0xf]
  %v927 = vld [vmem:[%s923 + $0xc] sm:$0xf]
  %v928 = vld [vmem:[%s923 + $0x10] sm:$0xf]
  %v929 = vld [vmem:[%s923 + $0x14] sm:$0xf]
  %v930 = vld [vmem:[%s923 + $0x18] sm:$0xf]
  %v931 = vld [vmem:[%s923 + $0x1c] sm:$0xf]
  %v932 = vld [vmem:[%s923 + $0x20] sm:$0xf]
  %v942 = vunpack.c.l.b16 %v924
  %v943 = vunpack.c.l.b16 %v925
  %v944 = vunpack.c.l.b16 %v926
  %v945 = vunpack.c.l.b16 %v927
  %v946 = vunpack.c.l.b16 %v928
  %v947 = vunpack.c.l.b16 %v929
  %v948 = vunpack.c.l.b16 %v930
  %v949 = vunpack.c.l.b16 %v931
  %v950 = vunpack.c.l.b16 %v932
  %v951 = vpack.c.b16 %v943, %v942
  %v952 = vpack.c.b16 %v945, %v944
  %v953 = vpack.c.b16 %v947, %v946
  %v954 = vpack.c.b16 %v949, %v948
  %v955 = vpack.c.b16 %v950, %v950
  %v961 = vsel %vm18, %v921, 0
  %v964 = vsel %vm18, %v922, 0
  %v967 = vsel %vm122, %v955, 0
  %969 = vmatprep.subr.bf16.mxu0 0
  %970 = vmatpush1.bf16.msra.mxu0 0
  %971 = vmatprep.subr.bf16.mxu0 0
  %972 = vmatpush1.bf16.msra.mxu0 0
  %973 = vmatprep.subr.bf16.mxu0 0
  %974 = vmatpush1.bf16.msra.mxu0 0
  %975 = vmatprep.subr.bf16.mxu0 0
  %976 = vmatpush1.bf16.msra.mxu0 %v967
  %977 = vmatprep.subr.bf16.mxu0 0
  %978 = vmatpush1.bf16.msra.mxu0 %v954
  %979 = vmatprep.subr.bf16.mxu0 0
  %980 = vmatpush1.bf16.msra.mxu0 %v953
  %981 = vmatprep.subr.bf16.mxu0 0
  %982 = vmatpush1.bf16.msra.mxu0 %v952
  %983 = vmatprep.subr.bf16.mxu0 0
  %984 = vmatpush1.bf16.msra.mxu0 %v951
  %985 = vmatprep.subr.bf16.mxu0 0
  %986 = vmatpush2.bf16.msra.mxu0 0
  %987 = vmatprep.subr.bf16.mxu0 0
  %988 = vmatpush2.bf16.msra.mxu0 0
  %989 = vmatprep.subr.bf16.mxu0 0
  %990 = vmatpush2.bf16.msra.mxu0 0
  %991 = vmatprep.subr.bf16.mxu0 0
  %992 = vmatpush2.bf16.msra.mxu0 0
  %993 = vmatprep.subr.bf16.mxu0 0
  %994 = vmatpush2.bf16.msra.mxu0 0
  %995 = vmatprep.subr.bf16.mxu0 0
  %996 = vmatpush2.bf16.msra.mxu0 0
  %997 = vmatprep.subr.bf16.mxu0 0
  %998 = vmatpush2.bf16.msra.mxu0 0
  %999 = vmatprep.subr.bf16.mxu0 0
  %1000 = vmatpush2.bf16.msra.mxu0 0
  %1001 = vmatprep.mubr.bf16.mxu0 0
  %1002 = vmatmul.mubr.bf16.gmra.mxu0 %v961
  %v1003 = vpop.f32.mrf.mxu0
  %v1004 = vadd.f32 0.0, %v1003
  %v1005 = vpop.f32.mrf.mxu0
  %v1006 = vpop.f32.mrf.mxu0
  %v1007 = vadd.f32 0.0, %v1006
  %v1008 = vpop.f32.mrf.mxu0
  %1009 = vmatprep.mubr.bf16.mxu0 0
  %1010 = vmatmul.mubr.bf16.gmra.mxu0 %v964
  %v1011 = vpop.f32.mrf.mxu0
  %v1012 = vadd.f32 0.0, %v1011
  %v1013 = vpop.f32.mrf.mxu0
  %v1014 = vpop.f32.mrf.mxu0
  %v1015 = vadd.f32 0.0, %v1014
  %v1016 = vpop.f32.mrf.mxu0
  %1017 = vdwg.mxu0
  %v1018 = vadd.f32 %v903, %v1004
  %v1019 = vadd.f32 %v906, %v1007
  %v1020 = vadd.f32 %v911, %v1012
  %v1021 = vadd.f32 %v914, %v1015
  %v1022 = vlaneseq
  %v1023 = vshrl.u32 %v1022, 7
  %v1024 = vsub.s32 0, %v1023
  %v1025 = vrot.slane %v33, %v1024
  %v1026 = vadd.f32 %v1018, %v1025
  %v1027 = vadd.f32 %v1019, %v1025
  %v1028 = vadd.f32 %v1020, %v1025
  %v1029 = vadd.f32 %v1021, %v1025
  %v1030 = vsel %vm373, %v1026, 0.0
  %v1031 = vsel %vm373, %v1027, 0.0
  %v1032 = vadd.f32 %v1030, %v1031
  %v1033 = vsel %vm373, %v1028, 0.0
  %v1034 = vadd.f32 %v1032, %v1033
  %v1035 = vsel %vm373, %v1029, 0.0
  %v1036 = vadd.f32 %v1034, %v1035
  %v1037 = vrot.slane %v1036, 4
  %v1038 = vadd.f32 %v1036, %v1037
  %v1039 = vrot.slane %v1038, 2
  %v1040 = vadd.f32 %v1038, %v1039
  %v1041 = vrot.slane %v1040, 1
  %v1042 = vadd.f32 %v1040, %v1041
  %1044 = vrot.lane.b32.xlu0 %v1042, 124
  %v1045 = vpop.permute.xlu0 %1044
  %v1047 = vadd.f32 %v1042, %v1045
  %1048 = vrot.lane.b32.xlu0 %v1042, 120
  %v1049 = vpop.permute.xlu0 %1048
  %v1051 = vadd.f32 %v1047, %v1049
  %1052 = vrot.lane.b32.xlu0 %v1042, 116
  %v1053 = vpop.permute.xlu0 %1052
  %v1055 = vadd.f32 %v1051, %v1053
  %1056 = vrot.lane.b32.xlu0 %v1042, 112
  %v1057 = vpop.permute.xlu0 %1056
  %v1059 = vadd.f32 %v1055, %v1057
  %1060 = vrot.lane.b32.xlu0 %v1042, 108
  %v1061 = vpop.permute.xlu0 %1060
  %v1063 = vadd.f32 %v1059, %v1061
  %1064 = vrot.lane.b32.xlu0 %v1042, 104
  %v1065 = vpop.permute.xlu0 %1064
  %v1067 = vadd.f32 %v1063, %v1065
  %1068 = vrot.lane.b32.xlu0 %v1042, 100
  %v1069 = vpop.permute.xlu0 %1068
  %v1071 = vadd.f32 %v1067, %v1069
  %1072 = vrot.lane.b32.xlu0 %v1042, 96
  %v1073 = vpop.permute.xlu0 %1072
  %v1075 = vadd.f32 %v1071, %v1073
  %1076 = vrot.lane.b32.xlu0 %v1042, 92
  %v1077 = vpop.permute.xlu0 %1076
  %v1079 = vadd.f32 %v1075, %v1077
  %1080 = vrot.lane.b32.xlu0 %v1042, 88
  %v1081 = vpop.permute.xlu0 %1080
  %v1083 = vadd.f32 %v1079, %v1081
  %1084 = vrot.lane.b32.xlu0 %v1042, 84
  %v1085 = vpop.permute.xlu0 %1084
  %v1087 = vadd.f32 %v1083, %v1085
  %1088 = vrot.lane.b32.xlu0 %v1042, 80
  %v1089 = vpop.permute.xlu0 %1088
  %v1091 = vadd.f32 %v1087, %v1089
  %1092 = vrot.lane.b32.xlu0 %v1042, 76
  %v1093 = vpop.permute.xlu0 %1092
  %v1095 = vadd.f32 %v1091, %v1093
  %1096 = vrot.lane.b32.xlu0 %v1042, 72
  %v1097 = vpop.permute.xlu0 %1096
  %v1099 = vadd.f32 %v1095, %v1097
  %1100 = vrot.lane.b32.xlu0 %v1042, 68
  %v1101 = vpop.permute.xlu0 %1100
  %v1103 = vadd.f32 %v1099, %v1101
  %v1104 = vmul.f32 %v1103, 0.001953125
  %1106 = vrot.lane.b32.xlu0 %v1104, 4
  %v1107 = vpop.permute.xlu0 %1106
  %1109 = vrot.lane.b32.xlu0 %v1104, 8
  %v1110 = vpop.permute.xlu0 %1109
  %1112 = vrot.lane.b32.xlu0 %v1104, 12
  %v1113 = vpop.permute.xlu0 %1112
  %1115 = vrot.lane.b32.xlu0 %v1104, 16
  %v1116 = vpop.permute.xlu0 %1115
  %1118 = vrot.lane.b32.xlu0 %v1104, 20
  %v1119 = vpop.permute.xlu0 %1118
  %1121 = vrot.lane.b32.xlu0 %v1104, 24
  %v1122 = vpop.permute.xlu0 %1121
  %1124 = vrot.lane.b32.xlu0 %v1104, 28
  %v1125 = vpop.permute.xlu0 %1124
  %1127 = vrot.lane.b32.xlu0 %v1104, 32
  %v1128 = vpop.permute.xlu0 %1127
  %1130 = vrot.lane.b32.xlu0 %v1104, 36
  %v1131 = vpop.permute.xlu0 %1130
  %1133 = vrot.lane.b32.xlu0 %v1104, 40
  %v1134 = vpop.permute.xlu0 %1133
  %1136 = vrot.lane.b32.xlu0 %v1104, 44
  %v1137 = vpop.permute.xlu0 %1136
  %1139 = vrot.lane.b32.xlu0 %v1104, 48
  %v1140 = vpop.permute.xlu0 %1139
  %1142 = vrot.lane.b32.xlu0 %v1104, 52
  %v1143 = vpop.permute.xlu0 %1142
  %1145 = vrot.lane.b32.xlu0 %v1104, 56
  %v1146 = vpop.permute.xlu0 %1145
  %1148 = vrot.lane.b32.xlu0 %v1104, 60
  %v1149 = vpop.permute.xlu0 %1148
  %v1151 = vsel %vm495, %v1104, %v1107
  %v1152 = vsel %vm497, %v1151, %v1110
  %v1153 = vsel %vm499, %v1152, %v1113
  %v1154 = vsel %vm501, %v1153, %v1116
  %v1155 = vsel %vm503, %v1154, %v1119
  %v1156 = vsel %vm505, %v1155, %v1122
  %v1157 = vsel %vm507, %v1156, %v1125
  %v1158 = vsel %vm509, %v1157, %v1128
  %v1159 = vsel %vm511, %v1158, %v1131
  %v1160 = vsel %vm513, %v1159, %v1134
  %v1161 = vsel %vm515, %v1160, %v1137
  %v1162 = vsel %vm517, %v1161, %v1140
  %v1163 = vsel %vm519, %v1162, %v1143
  %v1164 = vsel %vm521, %v1163, %v1146
  %v1165 = vsel %vm523, %v1164, %v1149
  %v1166 = vlaneseq
  %v1167 = vshrl.u32 %v1166, 7
  %v1168 = vsub.s32 0, %v1167
  %v1169 = vrot.slane %v1165, %v1168
  %v1170 = vsub.f32 %v1026, %v1169
  %v1171 = vsub.f32 %v1027, %v1169
  %v1172 = vsub.f32 %v1028, %v1169
  %v1173 = vsub.f32 %v1029, %v1169
  %v1174 = vmul.f32 %v1170, %v1170
  %v1175 = vmul.f32 %v1171, %v1171
  %v1176 = vmul.f32 %v1172, %v1172
  %v1177 = vmul.f32 %v1173, %v1173
  %v1178 = vsel %vm373, %v1174, 0.0
  %v1179 = vsel %vm373, %v1175, 0.0
  %v1180 = vadd.f32 %v1178, %v1179
  %v1181 = vsel %vm373, %v1176, 0.0
  %v1182 = vadd.f32 %v1180, %v1181
  %v1183 = vsel %vm373, %v1177, 0.0
  %v1184 = vadd.f32 %v1182, %v1183
  %v1185 = vrot.slane %v1184, 4
  %v1186 = vadd.f32 %v1184, %v1185
  %v1187 = vrot.slane %v1186, 2
  %v1188 = vadd.f32 %v1186, %v1187
  %v1189 = vrot.slane %v1188, 1
  %v1190 = vadd.f32 %v1188, %v1189
  %1192 = vrot.lane.b32.xlu0 %v1190, 124
  %v1193 = vpop.permute.xlu0 %1192
  %v1195 = vadd.f32 %v1190, %v1193
  %1196 = vrot.lane.b32.xlu0 %v1190, 120
  %v1197 = vpop.permute.xlu0 %1196
  %v1199 = vadd.f32 %v1195, %v1197
  %1200 = vrot.lane.b32.xlu0 %v1190, 116
  %v1201 = vpop.permute.xlu0 %1200
  %v1203 = vadd.f32 %v1199, %v1201
  %1204 = vrot.lane.b32.xlu0 %v1190, 112
  %v1205 = vpop.permute.xlu0 %1204
  %v1207 = vadd.f32 %v1203, %v1205
  %1208 = vrot.lane.b32.xlu0 %v1190, 108
  %v1209 = vpop.permute.xlu0 %1208
  %v1211 = vadd.f32 %v1207, %v1209
  %1212 = vrot.lane.b32.xlu0 %v1190, 104
  %v1213 = vpop.permute.xlu0 %1212
  %v1215 = vadd.f32 %v1211, %v1213
  %1216 = vrot.lane.b32.xlu0 %v1190, 100
  %v1217 = vpop.permute.xlu0 %1216
  %v1219 = vadd.f32 %v1215, %v1217
  %1220 = vrot.lane.b32.xlu0 %v1190, 96
  %v1221 = vpop.permute.xlu0 %1220
  %v1223 = vadd.f32 %v1219, %v1221
  %1224 = vrot.lane.b32.xlu0 %v1190, 92
  %v1225 = vpop.permute.xlu0 %1224
  %v1227 = vadd.f32 %v1223, %v1225
  %1228 = vrot.lane.b32.xlu0 %v1190, 88
  %v1229 = vpop.permute.xlu0 %1228
  %v1231 = vadd.f32 %v1227, %v1229
  %1232 = vrot.lane.b32.xlu0 %v1190, 84
  %v1233 = vpop.permute.xlu0 %1232
  %v1235 = vadd.f32 %v1231, %v1233
  %1236 = vrot.lane.b32.xlu0 %v1190, 80
  %v1237 = vpop.permute.xlu0 %1236
  %v1239 = vadd.f32 %v1235, %v1237
  %1240 = vrot.lane.b32.xlu0 %v1190, 76
  %v1241 = vpop.permute.xlu0 %1240
  %v1243 = vadd.f32 %v1239, %v1241
  %1244 = vrot.lane.b32.xlu0 %v1190, 72
  %v1245 = vpop.permute.xlu0 %1244
  %v1247 = vadd.f32 %v1243, %v1245
  %1248 = vrot.lane.b32.xlu0 %v1190, 68
  %v1249 = vpop.permute.xlu0 %1248
  %v1251 = vadd.f32 %v1247, %v1249
  %v1252 = vmul.f32 %v1251, 0.001953125
  %1254 = vrot.lane.b32.xlu0 %v1252, 4
  %v1255 = vpop.permute.xlu0 %1254
  %1257 = vrot.lane.b32.xlu0 %v1252, 8
  %v1258 = vpop.permute.xlu0 %1257
  %1260 = vrot.lane.b32.xlu0 %v1252, 12
  %v1261 = vpop.permute.xlu0 %1260
  %1263 = vrot.lane.b32.xlu0 %v1252, 16
  %v1264 = vpop.permute.xlu0 %1263
  %1266 = vrot.lane.b32.xlu0 %v1252, 20
  %v1267 = vpop.permute.xlu0 %1266
  %1269 = vrot.lane.b32.xlu0 %v1252, 24
  %v1270 = vpop.permute.xlu0 %1269
  %1272 = vrot.lane.b32.xlu0 %v1252, 28
  %v1273 = vpop.permute.xlu0 %1272
  %1275 = vrot.lane.b32.xlu0 %v1252, 32
  %v1276 = vpop.permute.xlu0 %1275
  %1278 = vrot.lane.b32.xlu0 %v1252, 36
  %v1279 = vpop.permute.xlu0 %1278
  %1281 = vrot.lane.b32.xlu0 %v1252, 40
  %v1282 = vpop.permute.xlu0 %1281
  %1284 = vrot.lane.b32.xlu0 %v1252, 44
  %v1285 = vpop.permute.xlu0 %1284
  %1287 = vrot.lane.b32.xlu0 %v1252, 48
  %v1288 = vpop.permute.xlu0 %1287
  %1290 = vrot.lane.b32.xlu0 %v1252, 52
  %v1291 = vpop.permute.xlu0 %1290
  %1293 = vrot.lane.b32.xlu0 %v1252, 56
  %v1294 = vpop.permute.xlu0 %1293
  %1296 = vrot.lane.b32.xlu0 %v1252, 60
  %v1297 = vpop.permute.xlu0 %1296
  %v1299 = vsel %vm495, %v1252, %v1255
  %v1300 = vsel %vm497, %v1299, %v1258
  %v1301 = vsel %vm499, %v1300, %v1261
  %v1302 = vsel %vm501, %v1301, %v1264
  %v1303 = vsel %vm503, %v1302, %v1267
  %v1304 = vsel %vm505, %v1303, %v1270
  %v1305 = vsel %vm507, %v1304, %v1273
  %v1306 = vsel %vm509, %v1305, %v1276
  %v1307 = vsel %vm511, %v1306, %v1279
  %v1308 = vsel %vm513, %v1307, %v1282
  %v1309 = vsel %vm515, %v1308, %v1285
  %v1310 = vsel %vm517, %v1309, %v1288
  %v1311 = vsel %vm519, %v1310, %v1291
  %v1312 = vsel %vm521, %v1311, %v1294
  %v1313 = vsel %vm523, %v1312, %v1297
  %v1314 = vadd.f32 %v1313, 1e-05
  %v1315 = vrsqrt.pop %v1314
  %v1316 = vmul.f32 %v34, %v1315
  %v1317 = vlaneseq
  %v1318 = vshrl.u32 %v1317, 7
  %v1319 = vsub.s32 0, %v1318
  %v1320 = vrot.slane %v1316, %v1319
  %v1321 = vmul.f32 %v1170, %v1320
  %v1322 = vmul.f32 %v1171, %v1320
  %v1323 = vmul.f32 %v1172, %v1320
  %v1324 = vmul.f32 %v1173, %v1320
  %v1325 = vlaneseq
  %v1326 = vshrl.u32 %v1325, 7
  %v1327 = vsub.s32 0, %v1326
  %v1328 = vrot.slane %v35, %v1327
  %v1329 = vadd.f32 %v1321, %v1328
  %v1330 = vadd.f32 %v1322, %v1328
  %v1331 = vadd.f32 %v1323, %v1328
  %v1332 = vadd.f32 %v1324, %v1328
  %v1333 = vadd.f32 %v1329, %v26
  %v1334 = vadd.f32 %v1330, %v27
  %v1335 = vadd.f32 %v1331, %v28
  %v1336 = vadd.f32 %v1332, %v29
  %v1337 = vmax.f32 %v1333, 0.0
  %v1338 = vmax.f32 %v1334, 0.0
  %v1339 = vmax.f32 %v1335, 0.0
  %v1340 = vmax.f32 %v1336, 0.0
  %1341 = vst.msk [vmem:[%s4] sm:$0xff] %vm373, %v1337
  %1342 = vst.msk [vmem:[%s4 + $0x8] sm:$0xff] %vm373, %v1338
  %1343 = vst.msk [vmem:[%s4 + $0x10] sm:$0xff] %vm373, %v1339
  %1344 = vst.msk [vmem:[%s4 + $0x18] sm:$0xff] %vm373, %v1340
  // Predicated region
  $region18: #{residual_block.1} parent=0 // pred_check
    _
  $region19: #{residual_block.1} parent=0 // pred_check_branch
    %1346 = sbr.rel (0) target = $region21
  $region20: #{residual_block.1} parent=0 // pred_region
    _
  $region21: #{residual_block.1} parent=0 // pred_fallthru
    _
  // Predicated region
  $region22: #{residual_block.1} parent=0 // pred_check
    _
  $region23: #{residual_block.1} parent=0 // pred_check_branch
    %1348 = sbr.rel (0) target = $region25
  $region24: #{residual_block.1} parent=0 // pred_region
    _
  $region25: #{residual_block.1} parent=0 // pred_fallthru
    _

</llo_original>
